<compile_context>
chip_gen: v5e
topology: v5e:2x2
jax: 0.10.0
libtpu: 0.0.40
codegen_flags: <defaults>
</compile_context>

<pallas_src>
import jax
import jax.numpy as jnp
from jax import lax
from jax.experimental import pallas as pl
from jax.experimental.pallas import tpu as pltpu


def weather_rnn_kernel(x_ref, wih0_ref, b0_ref, whh0_ref,
                       wih1_ref, whh1_ref, b1_ref, wfc_ref, bfc_ref,
                       out_ref, g1_ref):
    """x_ref:    (T, B, 1)  f32   input sequence, time-major
       wih0_ref: (1, 4H)    f32   layer-0 input weight (K = I = 1 -> VPU outer product)
       b0_ref:   (1, 4H)    f32   fused layer-0 bias (b_ih + b_hh)
       whh0_ref: (H, 4H)    bf16  layer-0 recurrent weight
       wih1_ref: (H, 4H)    bf16  layer-1 input weight
       whh1_ref: (H, 4H)    bf16  layer-1 recurrent weight
       b1_ref:   (1, 4H)    f32   fused layer-1 bias
       wfc_ref:  (H, O)     f32   fc weight
       bfc_ref:  (1, O)     f32   fc bias
       out_ref:  (B, O)     f32
       g1_ref:   (T, B, 4H) f32   VMEM scratch: layer-1 input-gate contributions
    """
    T, B, _ = x_ref.shape
    G = b0_ref.shape[-1]
    H = G // 4

    wih0 = wih0_ref[...]                                   # (1, 4H)
    whh0 = whh0_ref[...]                                   # (H, 4H) bf16
    wih1 = wih1_ref[...]                                   # (H, 4H) bf16
    whh1 = whh1_ref[...]                                   # (H, 4H) bf16
    # hoist bias broadcasts out of the loops (JAX does not CSE broadcasts)
    b0b = jnp.broadcast_to(b0_ref[...], (B, G))
    b1b = jnp.broadcast_to(b1_ref[...], (B, G))

    def lstm_cell(gates, c_prev):
        # PyTorch gate order: input, forget, cell(g), output.  Gate math stays f32
        # (v5e VPU/EUP have no bf16 path); only the matmul operands are bf16.
        i = jax.nn.sigmoid(gates[:, 0 * H:1 * H])
        f = jax.nn.sigmoid(gates[:, 1 * H:2 * H])
        g = jnp.tanh(gates[:, 2 * H:3 * H])
        o = jax.nn.sigmoid(gates[:, 3 * H:4 * H])
        c = f * c_prev + i * g
        h = o * jnp.tanh(c)
        return h.astype(jnp.bfloat16), c                   # h carried bf16 for the MXU

    zeros_b = jnp.zeros((B, H), jnp.bfloat16)
    zeros_f = jnp.zeros((B, H), jnp.float32)               # PyTorch default zero h0/c0

    # ---- pass 1: layer-0 recurrence; also emit layer-1's input-gate terms ------------
    def step0(t, carry):
        h0b, c0 = carry
        # input projection is a (B,1)*(1,4H) broadcast-mul (I=1), hides under MXU slack
        gates = (x_ref[t] * wih0 + b0b
                 + jnp.dot(h0b, whh0, preferred_element_type=jnp.float32))
        h0b, c0 = lstm_cell(gates, c0)
        # off-critical-path: layer-1 input-gate contribution for step t
        g1_ref[t] = jnp.dot(h0b, wih1, preferred_element_type=jnp.float32) + b1b
        return h0b, c0

    lax.fori_loop(0, T, step0, (zeros_b, zeros_f), unroll=True)

    # ---- pass 2: layer-1 recurrence (single K=H dot per step, no concat) --------------
    def step1(t, carry):
        h1b, c1 = carry
        gates = g1_ref[t] + jnp.dot(h1b, whh1, preferred_element_type=jnp.float32)
        return lstm_cell(gates, c1)

    h1b, _ = lax.fori_loop(0, T, step1, (zeros_b, zeros_f), unroll=True)

    # ---- epilogue: fc on the last timestep's layer-1 hidden state ----------------------
    out_ref[...] = (jnp.dot(h1b.astype(jnp.float32), wfc_ref[...],
                            preferred_element_type=jnp.float32)
                    + bfc_ref[...])


def prepare_weights(params):
    """One-time parameter prep (transposes, bias fusion, dtype casts).

    Call once and reuse; keeps all of this off the per-forward-call path.
    """
    f32, bf16 = jnp.float32, jnp.bfloat16
    return {
        "wih0": params["w_ih_l0"].T.astype(f32),                                # (1, 4H)
        "b0":   (params["b_ih_l0"] + params["b_hh_l0"]).astype(f32)[None, :],   # (1, 4H)
        "whh0": params["w_hh_l0"].T.astype(bf16),                               # (H, 4H)
        "wih1": params["w_ih_l1"].T.astype(bf16),                               # (H, 4H)
        "whh1": params["w_hh_l1"].T.astype(bf16),                               # (H, 4H)
        "b1":   (params["b_ih_l1"] + params["b_hh_l1"]).astype(f32)[None, :],   # (1, 4H)
        "wfc":  params["fc_w"].T.astype(f32),                                   # (H, O)
        "bfc":  params["fc_b"].astype(f32)[None, :],                            # (1, O)
    }


@jax.jit
def weather_rnn_forward(x, prep):
    """x: (B, T, I=1) float32, PyTorch batch_first layout. Returns (B, O)."""
    B, T, I = x.shape
    G = prep["b0"].shape[-1]
    H = G // 4
    O = prep["wfc"].shape[1]

    x_tm = jnp.transpose(x, (1, 0, 2)).astype(jnp.float32)      # (T, B, I) — only per-call prep

    vmem = pl.BlockSpec(memory_space=pltpu.MemorySpace.VMEM)
    return pl.pallas_call(
        weather_rnn_kernel,
        out_shape=jax.ShapeDtypeStruct((B, O), jnp.float32),
        in_specs=[vmem] * 9,
        out_specs=vmem,
        scratch_shapes=[pltpu.VMEM((T, B, G), jnp.float32)],     # layer-1 input gates
    )(x_tm, prep["wih0"], prep["b0"], prep["whh0"],
      prep["wih1"], prep["whh1"], prep["b1"], prep["wfc"], prep["bfc"])


def make_params(key, input_size=1, hidden_size=64, output_size=5):
    """Deterministic synthetic parameters matching nn.LSTM(1,64,2)+Linear(64,5)."""
    H = hidden_size
    bound = 1.0 / jnp.sqrt(jnp.float32(H))
    names_shapes = [
        ("w_ih_l0", (4 * H, input_size)),
        ("w_hh_l0", (4 * H, H)),
        ("b_ih_l0", (4 * H,)),
        ("b_hh_l0", (4 * H,)),
        ("w_ih_l1", (4 * H, H)),
        ("w_hh_l1", (4 * H, H)),
        ("b_ih_l1", (4 * H,)),
        ("b_hh_l1", (4 * H,)),
        ("fc_w", (output_size, H)),
        ("fc_b", (output_size,)),
    ]
    params = {}
    keys = jax.random.split(key, len(names_shapes))
    for k, (name, shape) in zip(keys, names_shapes):
        params[name] = jax.random.uniform(
            k, shape, dtype=jnp.float32, minval=-bound, maxval=bound)
    return params


def weather_rnn_reference(x, params):
    """Pure-JAX f32 reference of the PyTorch forward, for correctness checking."""
    B, T, I = x.shape
    H = params["w_hh_l0"].shape[1]

    def lstm_layer(seq, w_ih, w_hh, b_ih, b_hh):
        def cell(carry, xt):
            h, c = carry
            gates = xt @ w_ih.T + b_ih + h @ w_hh.T + b_hh
            i, f, g, o = jnp.split(gates, 4, axis=-1)
            i, f, o = jax.nn.sigmoid(i), jax.nn.sigmoid(f), jax.nn.sigmoid(o)
            g = jnp.tanh(g)
            c = f * c + i * g
            h = o * jnp.tanh(c)
            return (h, c), h
        init = (jnp.zeros((B, H), jnp.float32), jnp.zeros((B, H), jnp.float32))
        _, hs = lax.scan(cell, init, jnp.transpose(seq, (1, 0, 2)))
        return jnp.transpose(hs, (1, 0, 2))

    h1 = lstm_layer(x, params["w_ih_l0"], params["w_hh_l0"],
                    params["b_ih_l0"], params["b_hh_l0"])
    h2 = lstm_layer(h1, params["w_ih_l1"], params["w_hh_l1"],
                    params["b_ih_l1"], params["b_hh_l1"])
    last = h2[:, -1, :]
    return last @ params["fc_w"].T + params["fc_b"]


if __name__ == "__main__":
    B, T, I, H, O = 2, 8, 1, 64, 5
    key = jax.random.PRNGKey(0)
    pkey, xkey = jax.random.split(key)
    params = make_params(pkey, input_size=I, hidden_size=H, output_size=O)
    x = jax.random.normal(xkey, (B, T, I), dtype=jnp.float32)

    prep = prepare_weights(params)            # one-time weight prep (hoisted out of forward)
    out = jax.block_until_ready(weather_rnn_forward(x, prep))
    ref = jax.block_until_ready(weather_rnn_reference(x, params))

    assert out.shape == (B, O), out.shape
    # bf16 MXU operands in the recurrence loosen agreement vs the f32 reference
    # (accumulation and cell state stay f32); 3e-2 still catches any structural bug.
    assert jnp.allclose(out, ref, atol=3e-2, rtol=3e-2), (out, ref)
    print("KERNEL_OK")
</pallas_src>

<mosaic_0001>
module attributes {stable_mosaic.version = 11 : i64} {
  func.func @weather_rnn_kernel(%arg0: memref<8x2x1xf32, #tpu.memory_space<vmem>>, %arg1: memref<1x256xf32, #tpu.memory_space<vmem>>, %arg2: memref<1x256xf32, #tpu.memory_space<vmem>>, %arg3: memref<64x256xbf16, #tpu.memory_space<vmem>>, %arg4: memref<64x256xbf16, #tpu.memory_space<vmem>>, %arg5: memref<64x256xbf16, #tpu.memory_space<vmem>>, %arg6: memref<1x256xf32, #tpu.memory_space<vmem>>, %arg7: memref<64x5xf32, #tpu.memory_space<vmem>>, %arg8: memref<1x5xf32, #tpu.memory_space<vmem>>, %arg9: memref<2x5xf32, #tpu.memory_space<vmem>>, %arg10: memref<8x2x256xf32, #tpu.memory_space<vmem>>) attributes {dimension_semantics = [], scalar_prefetch = 0 : i64, scratch_operands = 1 : i64, tpu.core_type = #tpu.core_type<tc>} {
    %c0 = arith.constant 0 : index
    %c0_0 = arith.constant 0 : index
    %0 = vector.load %arg1[%c0, %c0_0] : memref<1x256xf32, #tpu.memory_space<vmem>>, vector<1x256xf32>
    %c0_1 = arith.constant 0 : index
    %c0_2 = arith.constant 0 : index
    %1 = vector.load %arg3[%c0_1, %c0_2] : memref<64x256xbf16, #tpu.memory_space<vmem>>, vector<64x256xbf16>
    %c0_3 = arith.constant 0 : index
    %c0_4 = arith.constant 0 : index
    %2 = vector.load %arg4[%c0_3, %c0_4] : memref<64x256xbf16, #tpu.memory_space<vmem>>, vector<64x256xbf16>
    %c0_5 = arith.constant 0 : index
    %c0_6 = arith.constant 0 : index
    %3 = vector.load %arg5[%c0_5, %c0_6] : memref<64x256xbf16, #tpu.memory_space<vmem>>, vector<64x256xbf16>
    %c0_7 = arith.constant 0 : index
    %c0_8 = arith.constant 0 : index
    %4 = vector.load %arg2[%c0_7, %c0_8] : memref<1x256xf32, #tpu.memory_space<vmem>>, vector<1x256xf32>
    %5 = vector.shape_cast %4 : vector<1x256xf32> to vector<1x256xf32>
    %6 = vector.broadcast %5 : vector<1x256xf32> to vector<2x256xf32>
    %c0_9 = arith.constant 0 : index
    %c0_10 = arith.constant 0 : index
    %7 = vector.load %arg6[%c0_9, %c0_10] : memref<1x256xf32, #tpu.memory_space<vmem>>, vector<1x256xf32>
    %8 = vector.shape_cast %7 : vector<1x256xf32> to vector<1x256xf32>
    %9 = vector.broadcast %8 : vector<1x256xf32> to vector<2x256xf32>
    %cst = arith.constant 0.000000e+00 : bf16
    %10 = vector.broadcast %cst : bf16 to vector<2x64xbf16>
    %cst_11 = arith.constant 0.000000e+00 : f32
    %11 = vector.broadcast %cst_11 : f32 to vector<2x64xf32>
    %c0_i32 = arith.constant 0 : i32
    %12 = arith.index_cast %c0_i32 : i32 to index
    %c0_12 = arith.constant 0 : index
    %c0_13 = arith.constant 0 : index
    %13 = vector.load %arg0[%12, %c0_12, %c0_13] : memref<8x2x1xf32, #tpu.memory_space<vmem>>, vector<1x2x1xf32>
    %14 = vector.shape_cast %13 : vector<1x2x1xf32> to vector<2x1xf32>
    %15 = vector.broadcast %14 : vector<2x1xf32> to vector<2x256xf32>
    %16 = vector.broadcast %0 : vector<1x256xf32> to vector<2x256xf32>
    %17 = arith.mulf %15, %16 : vector<2x256xf32>
    %18 = arith.addf %17, %6 : vector<2x256xf32>
    %cst_14 = arith.constant dense<0.000000e+00> : vector<2x256xf32>
    %19 = tpu.matmul %10, %1, %cst_14 {dimension_numbers = #tpu.dot_dimension_numbers<[1], [0], [0], [1], [0, 0, 1, 1], [], []>} : vector<2x64xbf16>, vector<64x256xbf16>, vector<2x256xf32> -> vector<2x256xf32>
    %20 = arith.addf %18, %19 : vector<2x256xf32>
    %21 = vector.extract_strided_slice %20 {offsets = [0, 0], sizes = [2, 64], strides = [1, 1]} : vector<2x256xf32> to vector<2x64xf32>
    %22 = arith.negf %21 : vector<2x64xf32>
    %23 = math.exp %22 : vector<2x64xf32>
    %cst_15 = arith.constant 1.000000e+00 : f32
    %24 = vector.broadcast %cst_15 : f32 to vector<2x64xf32>
    %25 = arith.addf %24, %23 : vector<2x64xf32>
    %26 = arith.divf %24, %25 : vector<2x64xf32>
    %27 = vector.extract_strided_slice %20 {offsets = [0, 64], sizes = [2, 64], strides = [1, 1]} : vector<2x256xf32> to vector<2x64xf32>
    %28 = arith.negf %27 : vector<2x64xf32>
    %29 = math.exp %28 : vector<2x64xf32>
    %cst_16 = arith.constant 1.000000e+00 : f32
    %30 = vector.broadcast %cst_16 : f32 to vector<2x64xf32>
    %31 = arith.addf %30, %29 : vector<2x64xf32>
    %32 = arith.divf %30, %31 : vector<2x64xf32>
    %33 = vector.extract_strided_slice %20 {offsets = [0, 128], sizes = [2, 64], strides = [1, 1]} : vector<2x256xf32> to vector<2x64xf32>
    %34 = math.tanh %33 : vector<2x64xf32>
    %35 = vector.extract_strided_slice %20 {offsets = [0, 192], sizes = [2, 64], strides = [1, 1]} : vector<2x256xf32> to vector<2x64xf32>
    %36 = arith.negf %35 : vector<2x64xf32>
    %37 = math.exp %36 : vector<2x64xf32>
    %cst_17 = arith.constant 1.000000e+00 : f32
    %38 = vector.broadcast %cst_17 : f32 to vector<2x64xf32>
    %39 = arith.addf %38, %37 : vector<2x64xf32>
    %40 = arith.divf %38, %39 : vector<2x64xf32>
    %41 = arith.mulf %32, %11 : vector<2x64xf32>
    %42 = arith.mulf %26, %34 : vector<2x64xf32>
    %43 = arith.addf %41, %42 : vector<2x64xf32>
    %44 = math.tanh %43 : vector<2x64xf32>
    %45 = arith.mulf %40, %44 : vector<2x64xf32>
    %46 = arith.truncf %45 : vector<2x64xf32> to vector<2x64xbf16>
    %cst_18 = arith.constant dense<0.000000e+00> : vector<2x256xf32>
    %47 = tpu.matmul %46, %2, %cst_18 {dimension_numbers = #tpu.dot_dimension_numbers<[1], [0], [0], [1], [0, 0, 1, 1], [], []>} : vector<2x64xbf16>, vector<64x256xbf16>, vector<2x256xf32> -> vector<2x256xf32>
    %48 = arith.addf %47, %9 : vector<2x256xf32>
    %49 = arith.index_cast %c0_i32 : i32 to index
    %c0_19 = arith.constant 0 : index
    %c0_20 = arith.constant 0 : index
    %50 = vector.load %arg10[%49, %c0_19, %c0_20] : memref<8x2x256xf32, #tpu.memory_space<vmem>>, vector<1x2x256xf32>
    %51 = vector.shape_cast %50 : vector<1x2x256xf32> to vector<2x256xf32>
    %52 = vector.shape_cast %48 : vector<2x256xf32> to vector<1x2x256xf32>
    tpu.vector_store %arg10[%49, %c0_19, %c0_20], %52 {strides = array<i32>} : memref<8x2x256xf32, #tpu.memory_space<vmem>>, vector<1x2x256xf32>,
    %c1_i32 = arith.constant 1 : i32
    %53 = arith.index_cast %c1_i32 : i32 to index
    %c0_21 = arith.constant 0 : index
    %c0_22 = arith.constant 0 : index
    %54 = vector.load %arg0[%53, %c0_21, %c0_22] : memref<8x2x1xf32, #tpu.memory_space<vmem>>, vector<1x2x1xf32>
    %55 = vector.shape_cast %54 : vector<1x2x1xf32> to vector<2x1xf32>
    %56 = vector.broadcast %55 : vector<2x1xf32> to vector<2x256xf32>
    %57 = vector.broadcast %0 : vector<1x256xf32> to vector<2x256xf32>
    %58 = arith.mulf %56, %57 : vector<2x256xf32>
    %59 = arith.addf %58, %6 : vector<2x256xf32>
    %cst_23 = arith.constant dense<0.000000e+00> : vector<2x256xf32>
    %60 = tpu.matmul %46, %1, %cst_23 {dimension_numbers = #tpu.dot_dimension_numbers<[1], [0], [0], [1], [0, 0, 1, 1], [], []>} : vector<2x64xbf16>, vector<64x256xbf16>, vector<2x256xf32> -> vector<2x256xf32>
    %61 = arith.addf %59, %60 : vector<2x256xf32>
    %62 = vector.extract_strided_slice %61 {offsets = [0, 0], sizes = [2, 64], strides = [1, 1]} : vector<2x256xf32> to vector<2x64xf32>
    %63 = arith.negf %62 : vector<2x64xf32>
    %64 = math.exp %63 : vector<2x64xf32>
    %cst_24 = arith.constant 1.000000e+00 : f32
    %65 = vector.broadcast %cst_24 : f32 to vector<2x64xf32>
    %66 = arith.addf %65, %64 : vector<2x64xf32>
    %67 = arith.divf %65, %66 : vector<2x64xf32>
    %68 = vector.extract_strided_slice %61 {offsets = [0, 64], sizes = [2, 64], strides = [1, 1]} : vector<2x256xf32> to vector<2x64xf32>
    %69 = arith.negf %68 : vector<2x64xf32>
    %70 = math.exp %69 : vector<2x64xf32>
    %cst_25 = arith.constant 1.000000e+00 : f32
    %71 = vector.broadcast %cst_25 : f32 to vector<2x64xf32>
    %72 = arith.addf %71, %70 : vector<2x64xf32>
    %73 = arith.divf %71, %72 : vector<2x64xf32>
    %74 = vector.extract_strided_slice %61 {offsets = [0, 128], sizes = [2, 64], strides = [1, 1]} : vector<2x256xf32> to vector<2x64xf32>
    %75 = math.tanh %74 : vector<2x64xf32>
    %76 = vector.extract_strided_slice %61 {offsets = [0, 192], sizes = [2, 64], strides = [1, 1]} : vector<2x256xf32> to vector<2x64xf32>
    %77 = arith.negf %76 : vector<2x64xf32>
    %78 = math.exp %77 : vector<2x64xf32>
    %cst_26 = arith.constant 1.000000e+00 : f32
    %79 = vector.broadcast %cst_26 : f32 to vector<2x64xf32>
    %80 = arith.addf %79, %78 : vector<2x64xf32>
    %81 = arith.divf %79, %80 : vector<2x64xf32>
    %82 = arith.mulf %73, %43 : vector<2x64xf32>
    %83 = arith.mulf %67, %75 : vector<2x64xf32>
    %84 = arith.addf %82, %83 : vector<2x64xf32>
    %85 = math.tanh %84 : vector<2x64xf32>
    %86 = arith.mulf %81, %85 : vector<2x64xf32>
    %87 = arith.truncf %86 : vector<2x64xf32> to vector<2x64xbf16>
    %cst_27 = arith.constant dense<0.000000e+00> : vector<2x256xf32>
    %88 = tpu.matmul %87, %2, %cst_27 {dimension_numbers = #tpu.dot_dimension_numbers<[1], [0], [0], [1], [0, 0, 1, 1], [], []>} : vector<2x64xbf16>, vector<64x256xbf16>, vector<2x256xf32> -> vector<2x256xf32>
    %89 = arith.addf %88, %9 : vector<2x256xf32>
    %90 = arith.index_cast %c1_i32 : i32 to index
    %c0_28 = arith.constant 0 : index
    %c0_29 = arith.constant 0 : index
    %91 = vector.load %arg10[%90, %c0_28, %c0_29] : memref<8x2x256xf32, #tpu.memory_space<vmem>>, vector<1x2x256xf32>
    %92 = vector.shape_cast %91 : vector<1x2x256xf32> to vector<2x256xf32>
    %93 = vector.shape_cast %89 : vector<2x256xf32> to vector<1x2x256xf32>
    tpu.vector_store %arg10[%90, %c0_28, %c0_29], %93 {strides = array<i32>} : memref<8x2x256xf32, #tpu.memory_space<vmem>>, vector<1x2x256xf32>,
    %c2_i32 = arith.constant 2 : i32
    %94 = arith.index_cast %c2_i32 : i32 to index
    %c0_30 = arith.constant 0 : index
    %c0_31 = arith.constant 0 : index
    %95 = vector.load %arg0[%94, %c0_30, %c0_31] : memref<8x2x1xf32, #tpu.memory_space<vmem>>, vector<1x2x1xf32>
    %96 = vector.shape_cast %95 : vector<1x2x1xf32> to vector<2x1xf32>
    %97 = vector.broadcast %96 : vector<2x1xf32> to vector<2x256xf32>
    %98 = vector.broadcast %0 : vector<1x256xf32> to vector<2x256xf32>
    %99 = arith.mulf %97, %98 : vector<2x256xf32>
    %100 = arith.addf %99, %6 : vector<2x256xf32>
    %cst_32 = arith.constant dense<0.000000e+00> : vector<2x256xf32>
    %101 = tpu.matmul %87, %1, %cst_32 {dimension_numbers = #tpu.dot_dimension_numbers<[1], [0], [0], [1], [0, 0, 1, 1], [], []>} : vector<2x64xbf16>, vector<64x256xbf16>, vector<2x256xf32> -> vector<2x256xf32>
    %102 = arith.addf %100, %101 : vector<2x256xf32>
    %103 = vector.extract_strided_slice %102 {offsets = [0, 0], sizes = [2, 64], strides = [1, 1]} : vector<2x256xf32> to vector<2x64xf32>
    %104 = arith.negf %103 : vector<2x64xf32>
    %105 = math.exp %104 : vector<2x64xf32>
    %cst_33 = arith.constant 1.000000e+00 : f32
    %106 = vector.broadcast %cst_33 : f32 to vector<2x64xf32>
    %107 = arith.addf %106, %105 : vector<2x64xf32>
    %108 = arith.divf %106, %107 : vector<2x64xf32>
    %109 = vector.extract_strided_slice %102 {offsets = [0, 64], sizes = [2, 64], strides = [1, 1]} : vector<2x256xf32> to vector<2x64xf32>
    %110 = arith.negf %109 : vector<2x64xf32>
    %111 = math.exp %110 : vector<2x64xf32>
    %cst_34 = arith.constant 1.000000e+00 : f32
    %112 = vector.broadcast %cst_34 : f32 to vector<2x64xf32>
    %113 = arith.addf %112, %111 : vector<2x64xf32>
    %114 = arith.divf %112, %113 : vector<2x64xf32>
    %115 = vector.extract_strided_slice %102 {offsets = [0, 128], sizes = [2, 64], strides = [1, 1]} : vector<2x256xf32> to vector<2x64xf32>
    %116 = math.tanh %115 : vector<2x64xf32>
    %117 = vector.extract_strided_slice %102 {offsets = [0, 192], sizes = [2, 64], strides = [1, 1]} : vector<2x256xf32> to vector<2x64xf32>
    %118 = arith.negf %117 : vector<2x64xf32>
    %119 = math.exp %118 : vector<2x64xf32>
    %cst_35 = arith.constant 1.000000e+00 : f32
    %120 = vector.broadcast %cst_35 : f32 to vector<2x64xf32>
    %121 = arith.addf %120, %119 : vector<2x64xf32>
    %122 = arith.divf %120, %121 : vector<2x64xf32>
    %123 = arith.mulf %114, %84 : vector<2x64xf32>
    %124 = arith.mulf %108, %116 : vector<2x64xf32>
    %125 = arith.addf %123, %124 : vector<2x64xf32>
    %126 = math.tanh %125 : vector<2x64xf32>
    %127 = arith.mulf %122, %126 : vector<2x64xf32>
    %128 = arith.truncf %127 : vector<2x64xf32> to vector<2x64xbf16>
    %cst_36 = arith.constant dense<0.000000e+00> : vector<2x256xf32>
    %129 = tpu.matmul %128, %2, %cst_36 {dimension_numbers = #tpu.dot_dimension_numbers<[1], [0], [0], [1], [0, 0, 1, 1], [], []>} : vector<2x64xbf16>, vector<64x256xbf16>, vector<2x256xf32> -> vector<2x256xf32>
    %130 = arith.addf %129, %9 : vector<2x256xf32>
    %131 = arith.index_cast %c2_i32 : i32 to index
    %c0_37 = arith.constant 0 : index
    %c0_38 = arith.constant 0 : index
    %132 = vector.load %arg10[%131, %c0_37, %c0_38] : memref<8x2x256xf32, #tpu.memory_space<vmem>>, vector<1x2x256xf32>
    %133 = vector.shape_cast %132 : vector<1x2x256xf32> to vector<2x256xf32>
    %134 = vector.shape_cast %130 : vector<2x256xf32> to vector<1x2x256xf32>
    tpu.vector_store %arg10[%131, %c0_37, %c0_38], %134 {strides = array<i32>} : memref<8x2x256xf32, #tpu.memory_space<vmem>>, vector<1x2x256xf32>,
    %c3_i32 = arith.constant 3 : i32
    %135 = arith.index_cast %c3_i32 : i32 to index
    %c0_39 = arith.constant 0 : index
    %c0_40 = arith.constant 0 : index
    %136 = vector.load %arg0[%135, %c0_39, %c0_40] : memref<8x2x1xf32, #tpu.memory_space<vmem>>, vector<1x2x1xf32>
    %137 = vector.shape_cast %136 : vector<1x2x1xf32> to vector<2x1xf32>
    %138 = vector.broadcast %137 : vector<2x1xf32> to vector<2x256xf32>
    %139 = vector.broadcast %0 : vector<1x256xf32> to vector<2x256xf32>
    %140 = arith.mulf %138, %139 : vector<2x256xf32>
    %141 = arith.addf %140, %6 : vector<2x256xf32>
    %cst_41 = arith.constant dense<0.000000e+00> : vector<2x256xf32>
    %142 = tpu.matmul %128, %1, %cst_41 {dimension_numbers = #tpu.dot_dimension_numbers<[1], [0], [0], [1], [0, 0, 1, 1], [], []>} : vector<2x64xbf16>, vector<64x256xbf16>, vector<2x256xf32> -> vector<2x256xf32>
    %143 = arith.addf %141, %142 : vector<2x256xf32>
    %144 = vector.extract_strided_slice %143 {offsets = [0, 0], sizes = [2, 64], strides = [1, 1]} : vector<2x256xf32> to vector<2x64xf32>
    %145 = arith.negf %144 : vector<2x64xf32>
    %146 = math.exp %145 : vector<2x64xf32>
    %cst_42 = arith.constant 1.000000e+00 : f32
    %147 = vector.broadcast %cst_42 : f32 to vector<2x64xf32>
    %148 = arith.addf %147, %146 : vector<2x64xf32>
    %149 = arith.divf %147, %148 : vector<2x64xf32>
    %150 = vector.extract_strided_slice %143 {offsets = [0, 64], sizes = [2, 64], strides = [1, 1]} : vector<2x256xf32> to vector<2x64xf32>
    %151 = arith.negf %150 : vector<2x64xf32>
    %152 = math.exp %151 : vector<2x64xf32>
    %cst_43 = arith.constant 1.000000e+00 : f32
    %153 = vector.broadcast %cst_43 : f32 to vector<2x64xf32>
    %154 = arith.addf %153, %152 : vector<2x64xf32>
    %155 = arith.divf %153, %154 : vector<2x64xf32>
    %156 = vector.extract_strided_slice %143 {offsets = [0, 128], sizes = [2, 64], strides = [1, 1]} : vector<2x256xf32> to vector<2x64xf32>
    %157 = math.tanh %156 : vector<2x64xf32>
    %158 = vector.extract_strided_slice %143 {offsets = [0, 192], sizes = [2, 64], strides = [1, 1]} : vector<2x256xf32> to vector<2x64xf32>
    %159 = arith.negf %158 : vector<2x64xf32>
    %160 = math.exp %159 : vector<2x64xf32>
    %cst_44 = arith.constant 1.000000e+00 : f32
    %161 = vector.broadcast %cst_44 : f32 to vector<2x64xf32>
    %162 = arith.addf %161, %160 : vector<2x64xf32>
    %163 = arith.divf %161, %162 : vector<2x64xf32>
    %164 = arith.mulf %155, %125 : vector<2x64xf32>
    %165 = arith.mulf %149, %157 : vector<2x64xf32>
    %166 = arith.addf %164, %165 : vector<2x64xf32>
    %167 = math.tanh %166 : vector<2x64xf32>
    %168 = arith.mulf %163, %167 : vector<2x64xf32>
    %169 = arith.truncf %168 : vector<2x64xf32> to vector<2x64xbf16>
    %cst_45 = arith.constant dense<0.000000e+00> : vector<2x256xf32>
    %170 = tpu.matmul %169, %2, %cst_45 {dimension_numbers = #tpu.dot_dimension_numbers<[1], [0], [0], [1], [0, 0, 1, 1], [], []>} : vector<2x64xbf16>, vector<64x256xbf16>, vector<2x256xf32> -> vector<2x256xf32>
    %171 = arith.addf %170, %9 : vector<2x256xf32>
    %172 = arith.index_cast %c3_i32 : i32 to index
    %c0_46 = arith.constant 0 : index
    %c0_47 = arith.constant 0 : index
    %173 = vector.load %arg10[%172, %c0_46, %c0_47] : memref<8x2x256xf32, #tpu.memory_space<vmem>>, vector<1x2x256xf32>
    %174 = vector.shape_cast %173 : vector<1x2x256xf32> to vector<2x256xf32>
    %175 = vector.shape_cast %171 : vector<2x256xf32> to vector<1x2x256xf32>
    tpu.vector_store %arg10[%172, %c0_46, %c0_47], %175 {strides = array<i32>} : memref<8x2x256xf32, #tpu.memory_space<vmem>>, vector<1x2x256xf32>,
    %c4_i32 = arith.constant 4 : i32
    %176 = arith.index_cast %c4_i32 : i32 to index
    %c0_48 = arith.constant 0 : index
    %c0_49 = arith.constant 0 : index
    %177 = vector.load %arg0[%176, %c0_48, %c0_49] : memref<8x2x1xf32, #tpu.memory_space<vmem>>, vector<1x2x1xf32>
    %178 = vector.shape_cast %177 : vector<1x2x1xf32> to vector<2x1xf32>
    %179 = vector.broadcast %178 : vector<2x1xf32> to vector<2x256xf32>
    %180 = vector.broadcast %0 : vector<1x256xf32> to vector<2x256xf32>
    %181 = arith.mulf %179, %180 : vector<2x256xf32>
    %182 = arith.addf %181, %6 : vector<2x256xf32>
    %cst_50 = arith.constant dense<0.000000e+00> : vector<2x256xf32>
    %183 = tpu.matmul %169, %1, %cst_50 {dimension_numbers = #tpu.dot_dimension_numbers<[1], [0], [0], [1], [0, 0, 1, 1], [], []>} : vector<2x64xbf16>, vector<64x256xbf16>, vector<2x256xf32> -> vector<2x256xf32>
    %184 = arith.addf %182, %183 : vector<2x256xf32>
    %185 = vector.extract_strided_slice %184 {offsets = [0, 0], sizes = [2, 64], strides = [1, 1]} : vector<2x256xf32> to vector<2x64xf32>
    %186 = arith.negf %185 : vector<2x64xf32>
    %187 = math.exp %186 : vector<2x64xf32>
    %cst_51 = arith.constant 1.000000e+00 : f32
    %188 = vector.broadcast %cst_51 : f32 to vector<2x64xf32>
    %189 = arith.addf %188, %187 : vector<2x64xf32>
    %190 = arith.divf %188, %189 : vector<2x64xf32>
    %191 = vector.extract_strided_slice %184 {offsets = [0, 64], sizes = [2, 64], strides = [1, 1]} : vector<2x256xf32> to vector<2x64xf32>
    %192 = arith.negf %191 : vector<2x64xf32>
    %193 = math.exp %192 : vector<2x64xf32>
    %cst_52 = arith.constant 1.000000e+00 : f32
    %194 = vector.broadcast %cst_52 : f32 to vector<2x64xf32>
    %195 = arith.addf %194, %193 : vector<2x64xf32>
    %196 = arith.divf %194, %195 : vector<2x64xf32>
    %197 = vector.extract_strided_slice %184 {offsets = [0, 128], sizes = [2, 64], strides = [1, 1]} : vector<2x256xf32> to vector<2x64xf32>
    %198 = math.tanh %197 : vector<2x64xf32>
    %199 = vector.extract_strided_slice %184 {offsets = [0, 192], sizes = [2, 64], strides = [1, 1]} : vector<2x256xf32> to vector<2x64xf32>
    %200 = arith.negf %199 : vector<2x64xf32>
    %201 = math.exp %200 : vector<2x64xf32>
    %cst_53 = arith.constant 1.000000e+00 : f32
    %202 = vector.broadcast %cst_53 : f32 to vector<2x64xf32>
    %203 = arith.addf %202, %201 : vector<2x64xf32>
    %204 = arith.divf %202, %203 : vector<2x64xf32>
    %205 = arith.mulf %196, %166 : vector<2x64xf32>
    %206 = arith.mulf %190, %198 : vector<2x64xf32>
    %207 = arith.addf %205, %206 : vector<2x64xf32>
    %208 = math.tanh %207 : vector<2x64xf32>
    %209 = arith.mulf %204, %208 : vector<2x64xf32>
    %210 = arith.truncf %209 : vector<2x64xf32> to vector<2x64xbf16>
    %cst_54 = arith.constant dense<0.000000e+00> : vector<2x256xf32>
    %211 = tpu.matmul %210, %2, %cst_54 {dimension_numbers = #tpu.dot_dimension_numbers<[1], [0], [0], [1], [0, 0, 1, 1], [], []>} : vector<2x64xbf16>, vector<64x256xbf16>, vector<2x256xf32> -> vector<2x256xf32>
    %212 = arith.addf %211, %9 : vector<2x256xf32>
    %213 = arith.index_cast %c4_i32 : i32 to index
    %c0_55 = arith.constant 0 : index
    %c0_56 = arith.constant 0 : index
    %214 = vector.load %arg10[%213, %c0_55, %c0_56] : memref<8x2x256xf32, #tpu.memory_space<vmem>>, vector<1x2x256xf32>
    %215 = vector.shape_cast %214 : vector<1x2x256xf32> to vector<2x256xf32>
    %216 = vector.shape_cast %212 : vector<2x256xf32> to vector<1x2x256xf32>
    tpu.vector_store %arg10[%213, %c0_55, %c0_56], %216 {strides = array<i32>} : memref<8x2x256xf32, #tpu.memory_space<vmem>>, vector<1x2x256xf32>,
    %c5_i32 = arith.constant 5 : i32
    %217 = arith.index_cast %c5_i32 : i32 to index
    %c0_57 = arith.constant 0 : index
    %c0_58 = arith.constant 0 : index
    %218 = vector.load %arg0[%217, %c0_57, %c0_58] : memref<8x2x1xf32, #tpu.memory_space<vmem>>, vector<1x2x1xf32>
    %219 = vector.shape_cast %218 : vector<1x2x1xf32> to vector<2x1xf32>
    %220 = vector.broadcast %219 : vector<2x1xf32> to vector<2x256xf32>
    %221 = vector.broadcast %0 : vector<1x256xf32> to vector<2x256xf32>
    %222 = arith.mulf %220, %221 : vector<2x256xf32>
    %223 = arith.addf %222, %6 : vector<2x256xf32>
    %cst_59 = arith.constant dense<0.000000e+00> : vector<2x256xf32>
    %224 = tpu.matmul %210, %1, %cst_59 {dimension_numbers = #tpu.dot_dimension_numbers<[1], [0], [0], [1], [0, 0, 1, 1], [], []>} : vector<2x64xbf16>, vector<64x256xbf16>, vector<2x256xf32> -> vector<2x256xf32>
    %225 = arith.addf %223, %224 : vector<2x256xf32>
    %226 = vector.extract_strided_slice %225 {offsets = [0, 0], sizes = [2, 64], strides = [1, 1]} : vector<2x256xf32> to vector<2x64xf32>
    %227 = arith.negf %226 : vector<2x64xf32>
    %228 = math.exp %227 : vector<2x64xf32>
    %cst_60 = arith.constant 1.000000e+00 : f32
    %229 = vector.broadcast %cst_60 : f32 to vector<2x64xf32>
    %230 = arith.addf %229, %228 : vector<2x64xf32>
    %231 = arith.divf %229, %230 : vector<2x64xf32>
    %232 = vector.extract_strided_slice %225 {offsets = [0, 64], sizes = [2, 64], strides = [1, 1]} : vector<2x256xf32> to vector<2x64xf32>
    %233 = arith.negf %232 : vector<2x64xf32>
    %234 = math.exp %233 : vector<2x64xf32>
    %cst_61 = arith.constant 1.000000e+00 : f32
    %235 = vector.broadcast %cst_61 : f32 to vector<2x64xf32>
    %236 = arith.addf %235, %234 : vector<2x64xf32>
    %237 = arith.divf %235, %236 : vector<2x64xf32>
    %238 = vector.extract_strided_slice %225 {offsets = [0, 128], sizes = [2, 64], strides = [1, 1]} : vector<2x256xf32> to vector<2x64xf32>
    %239 = math.tanh %238 : vector<2x64xf32>
    %240 = vector.extract_strided_slice %225 {offsets = [0, 192], sizes = [2, 64], strides = [1, 1]} : vector<2x256xf32> to vector<2x64xf32>
    %241 = arith.negf %240 : vector<2x64xf32>
    %242 = math.exp %241 : vector<2x64xf32>
    %cst_62 = arith.constant 1.000000e+00 : f32
    %243 = vector.broadcast %cst_62 : f32 to vector<2x64xf32>
    %244 = arith.addf %243, %242 : vector<2x64xf32>
    %245 = arith.divf %243, %244 : vector<2x64xf32>
    %246 = arith.mulf %237, %207 : vector<2x64xf32>
    %247 = arith.mulf %231, %239 : vector<2x64xf32>
    %248 = arith.addf %246, %247 : vector<2x64xf32>
    %249 = math.tanh %248 : vector<2x64xf32>
    %250 = arith.mulf %245, %249 : vector<2x64xf32>
    %251 = arith.truncf %250 : vector<2x64xf32> to vector<2x64xbf16>
    %cst_63 = arith.constant dense<0.000000e+00> : vector<2x256xf32>
    %252 = tpu.matmul %251, %2, %cst_63 {dimension_numbers = #tpu.dot_dimension_numbers<[1], [0], [0], [1], [0, 0, 1, 1], [], []>} : vector<2x64xbf16>, vector<64x256xbf16>, vector<2x256xf32> -> vector<2x256xf32>
    %253 = arith.addf %252, %9 : vector<2x256xf32>
    %254 = arith.index_cast %c5_i32 : i32 to index
    %c0_64 = arith.constant 0 : index
    %c0_65 = arith.constant 0 : index
    %255 = vector.load %arg10[%254, %c0_64, %c0_65] : memref<8x2x256xf32, #tpu.memory_space<vmem>>, vector<1x2x256xf32>
    %256 = vector.shape_cast %255 : vector<1x2x256xf32> to vector<2x256xf32>
    %257 = vector.shape_cast %253 : vector<2x256xf32> to vector<1x2x256xf32>
    tpu.vector_store %arg10[%254, %c0_64, %c0_65], %257 {strides = array<i32>} : memref<8x2x256xf32, #tpu.memory_space<vmem>>, vector<1x2x256xf32>,
    %c6_i32 = arith.constant 6 : i32
    %258 = arith.index_cast %c6_i32 : i32 to index
    %c0_66 = arith.constant 0 : index
    %c0_67 = arith.constant 0 : index
    %259 = vector.load %arg0[%258, %c0_66, %c0_67] : memref<8x2x1xf32, #tpu.memory_space<vmem>>, vector<1x2x1xf32>
    %260 = vector.shape_cast %259 : vector<1x2x1xf32> to vector<2x1xf32>
    %261 = vector.broadcast %260 : vector<2x1xf32> to vector<2x256xf32>
    %262 = vector.broadcast %0 : vector<1x256xf32> to vector<2x256xf32>
    %263 = arith.mulf %261, %262 : vector<2x256xf32>
    %264 = arith.addf %263, %6 : vector<2x256xf32>
    %cst_68 = arith.constant dense<0.000000e+00> : vector<2x256xf32>
    %265 = tpu.matmul %251, %1, %cst_68 {dimension_numbers = #tpu.dot_dimension_numbers<[1], [0], [0], [1], [0, 0, 1, 1], [], []>} : vector<2x64xbf16>, vector<64x256xbf16>, vector<2x256xf32> -> vector<2x256xf32>
    %266 = arith.addf %264, %265 : vector<2x256xf32>
    %267 = vector.extract_strided_slice %266 {offsets = [0, 0], sizes = [2, 64], strides = [1, 1]} : vector<2x256xf32> to vector<2x64xf32>
    %268 = arith.negf %267 : vector<2x64xf32>
    %269 = math.exp %268 : vector<2x64xf32>
    %cst_69 = arith.constant 1.000000e+00 : f32
    %270 = vector.broadcast %cst_69 : f32 to vector<2x64xf32>
    %271 = arith.addf %270, %269 : vector<2x64xf32>
    %272 = arith.divf %270, %271 : vector<2x64xf32>
    %273 = vector.extract_strided_slice %266 {offsets = [0, 64], sizes = [2, 64], strides = [1, 1]} : vector<2x256xf32> to vector<2x64xf32>
    %274 = arith.negf %273 : vector<2x64xf32>
    %275 = math.exp %274 : vector<2x64xf32>
    %cst_70 = arith.constant 1.000000e+00 : f32
    %276 = vector.broadcast %cst_70 : f32 to vector<2x64xf32>
    %277 = arith.addf %276, %275 : vector<2x64xf32>
    %278 = arith.divf %276, %277 : vector<2x64xf32>
    %279 = vector.extract_strided_slice %266 {offsets = [0, 128], sizes = [2, 64], strides = [1, 1]} : vector<2x256xf32> to vector<2x64xf32>
    %280 = math.tanh %279 : vector<2x64xf32>
    %281 = vector.extract_strided_slice %266 {offsets = [0, 192], sizes = [2, 64], strides = [1, 1]} : vector<2x256xf32> to vector<2x64xf32>
    %282 = arith.negf %281 : vector<2x64xf32>
    %283 = math.exp %282 : vector<2x64xf32>
    %cst_71 = arith.constant 1.000000e+00 : f32
    %284 = vector.broadcast %cst_71 : f32 to vector<2x64xf32>
    %285 = arith.addf %284, %283 : vector<2x64xf32>
    %286 = arith.divf %284, %285 : vector<2x64xf32>
    %287 = arith.mulf %278, %248 : vector<2x64xf32>
    %288 = arith.mulf %272, %280 : vector<2x64xf32>
    %289 = arith.addf %287, %288 : vector<2x64xf32>
    %290 = math.tanh %289 : vector<2x64xf32>
    %291 = arith.mulf %286, %290 : vector<2x64xf32>
    %292 = arith.truncf %291 : vector<2x64xf32> to vector<2x64xbf16>
    %cst_72 = arith.constant dense<0.000000e+00> : vector<2x256xf32>
    %293 = tpu.matmul %292, %2, %cst_72 {dimension_numbers = #tpu.dot_dimension_numbers<[1], [0], [0], [1], [0, 0, 1, 1], [], []>} : vector<2x64xbf16>, vector<64x256xbf16>, vector<2x256xf32> -> vector<2x256xf32>
    %294 = arith.addf %293, %9 : vector<2x256xf32>
    %295 = arith.index_cast %c6_i32 : i32 to index
    %c0_73 = arith.constant 0 : index
    %c0_74 = arith.constant 0 : index
    %296 = vector.load %arg10[%295, %c0_73, %c0_74] : memref<8x2x256xf32, #tpu.memory_space<vmem>>, vector<1x2x256xf32>
    %297 = vector.shape_cast %296 : vector<1x2x256xf32> to vector<2x256xf32>
    %298 = vector.shape_cast %294 : vector<2x256xf32> to vector<1x2x256xf32>
    tpu.vector_store %arg10[%295, %c0_73, %c0_74], %298 {strides = array<i32>} : memref<8x2x256xf32, #tpu.memory_space<vmem>>, vector<1x2x256xf32>,
    %c7_i32 = arith.constant 7 : i32
    %299 = arith.index_cast %c7_i32 : i32 to index
    %c0_75 = arith.constant 0 : index
    %c0_76 = arith.constant 0 : index
    %300 = vector.load %arg0[%299, %c0_75, %c0_76] : memref<8x2x1xf32, #tpu.memory_space<vmem>>, vector<1x2x1xf32>
    %301 = vector.shape_cast %300 : vector<1x2x1xf32> to vector<2x1xf32>
    %302 = vector.broadcast %301 : vector<2x1xf32> to vector<2x256xf32>
    %303 = vector.broadcast %0 : vector<1x256xf32> to vector<2x256xf32>
    %304 = arith.mulf %302, %303 : vector<2x256xf32>
    %305 = arith.addf %304, %6 : vector<2x256xf32>
    %cst_77 = arith.constant dense<0.000000e+00> : vector<2x256xf32>
    %306 = tpu.matmul %292, %1, %cst_77 {dimension_numbers = #tpu.dot_dimension_numbers<[1], [0], [0], [1], [0, 0, 1, 1], [], []>} : vector<2x64xbf16>, vector<64x256xbf16>, vector<2x256xf32> -> vector<2x256xf32>
    %307 = arith.addf %305, %306 : vector<2x256xf32>
    %308 = vector.extract_strided_slice %307 {offsets = [0, 0], sizes = [2, 64], strides = [1, 1]} : vector<2x256xf32> to vector<2x64xf32>
    %309 = arith.negf %308 : vector<2x64xf32>
    %310 = math.exp %309 : vector<2x64xf32>
    %cst_78 = arith.constant 1.000000e+00 : f32
    %311 = vector.broadcast %cst_78 : f32 to vector<2x64xf32>
    %312 = arith.addf %311, %310 : vector<2x64xf32>
    %313 = arith.divf %311, %312 : vector<2x64xf32>
    %314 = vector.extract_strided_slice %307 {offsets = [0, 64], sizes = [2, 64], strides = [1, 1]} : vector<2x256xf32> to vector<2x64xf32>
    %315 = arith.negf %314 : vector<2x64xf32>
    %316 = math.exp %315 : vector<2x64xf32>
    %cst_79 = arith.constant 1.000000e+00 : f32
    %317 = vector.broadcast %cst_79 : f32 to vector<2x64xf32>
    %318 = arith.addf %317, %316 : vector<2x64xf32>
    %319 = arith.divf %317, %318 : vector<2x64xf32>
    %320 = vector.extract_strided_slice %307 {offsets = [0, 128], sizes = [2, 64], strides = [1, 1]} : vector<2x256xf32> to vector<2x64xf32>
    %321 = math.tanh %320 : vector<2x64xf32>
    %322 = vector.extract_strided_slice %307 {offsets = [0, 192], sizes = [2, 64], strides = [1, 1]} : vector<2x256xf32> to vector<2x64xf32>
    %323 = arith.negf %322 : vector<2x64xf32>
    %324 = math.exp %323 : vector<2x64xf32>
    %cst_80 = arith.constant 1.000000e+00 : f32
    %325 = vector.broadcast %cst_80 : f32 to vector<2x64xf32>
    %326 = arith.addf %325, %324 : vector<2x64xf32>
    %327 = arith.divf %325, %326 : vector<2x64xf32>
    %328 = arith.mulf %319, %289 : vector<2x64xf32>
    %329 = arith.mulf %313, %321 : vector<2x64xf32>
    %330 = arith.addf %328, %329 : vector<2x64xf32>
    %331 = math.tanh %330 : vector<2x64xf32>
    %332 = arith.mulf %327, %331 : vector<2x64xf32>
    %333 = arith.truncf %332 : vector<2x64xf32> to vector<2x64xbf16>
    %cst_81 = arith.constant dense<0.000000e+00> : vector<2x256xf32>
    %334 = tpu.matmul %333, %2, %cst_81 {dimension_numbers = #tpu.dot_dimension_numbers<[1], [0], [0], [1], [0, 0, 1, 1], [], []>} : vector<2x64xbf16>, vector<64x256xbf16>, vector<2x256xf32> -> vector<2x256xf32>
    %335 = arith.addf %334, %9 : vector<2x256xf32>
    %336 = arith.index_cast %c7_i32 : i32 to index
    %c0_82 = arith.constant 0 : index
    %c0_83 = arith.constant 0 : index
    %337 = vector.load %arg10[%336, %c0_82, %c0_83] : memref<8x2x256xf32, #tpu.memory_space<vmem>>, vector<1x2x256xf32>
    %338 = vector.shape_cast %337 : vector<1x2x256xf32> to vector<2x256xf32>
    %339 = vector.shape_cast %335 : vector<2x256xf32> to vector<1x2x256xf32>
    tpu.vector_store %arg10[%336, %c0_82, %c0_83], %339 {strides = array<i32>} : memref<8x2x256xf32, #tpu.memory_space<vmem>>, vector<1x2x256xf32>,
    %c8_i32 = arith.constant 8 : i32
    %c0_i32_84 = arith.constant 0 : i32
    %340 = arith.index_cast %c0_i32_84 : i32 to index
    %c0_85 = arith.constant 0 : index
    %c0_86 = arith.constant 0 : index
    %341 = vector.load %arg10[%340, %c0_85, %c0_86] : memref<8x2x256xf32, #tpu.memory_space<vmem>>, vector<1x2x256xf32>
    %342 = vector.shape_cast %341 : vector<1x2x256xf32> to vector<2x256xf32>
    %cst_87 = arith.constant dense<0.000000e+00> : vector<2x256xf32>
    %343 = tpu.matmul %10, %3, %cst_87 {dimension_numbers = #tpu.dot_dimension_numbers<[1], [0], [0], [1], [0, 0, 1, 1], [], []>} : vector<2x64xbf16>, vector<64x256xbf16>, vector<2x256xf32> -> vector<2x256xf32>
    %344 = arith.addf %342, %343 : vector<2x256xf32>
    %345 = vector.extract_strided_slice %344 {offsets = [0, 0], sizes = [2, 64], strides = [1, 1]} : vector<2x256xf32> to vector<2x64xf32>
    %346 = arith.negf %345 : vector<2x64xf32>
    %347 = math.exp %346 : vector<2x64xf32>
    %cst_88 = arith.constant 1.000000e+00 : f32
    %348 = vector.broadcast %cst_88 : f32 to vector<2x64xf32>
    %349 = arith.addf %348, %347 : vector<2x64xf32>
    %350 = arith.divf %348, %349 : vector<2x64xf32>
    %351 = vector.extract_strided_slice %344 {offsets = [0, 64], sizes = [2, 64], strides = [1, 1]} : vector<2x256xf32> to vector<2x64xf32>
    %352 = arith.negf %351 : vector<2x64xf32>
    %353 = math.exp %352 : vector<2x64xf32>
    %cst_89 = arith.constant 1.000000e+00 : f32
    %354 = vector.broadcast %cst_89 : f32 to vector<2x64xf32>
    %355 = arith.addf %354, %353 : vector<2x64xf32>
    %356 = arith.divf %354, %355 : vector<2x64xf32>
    %357 = vector.extract_strided_slice %344 {offsets = [0, 128], sizes = [2, 64], strides = [1, 1]} : vector<2x256xf32> to vector<2x64xf32>
    %358 = math.tanh %357 : vector<2x64xf32>
    %359 = vector.extract_strided_slice %344 {offsets = [0, 192], sizes = [2, 64], strides = [1, 1]} : vector<2x256xf32> to vector<2x64xf32>
    %360 = arith.negf %359 : vector<2x64xf32>
    %361 = math.exp %360 : vector<2x64xf32>
    %cst_90 = arith.constant 1.000000e+00 : f32
    %362 = vector.broadcast %cst_90 : f32 to vector<2x64xf32>
    %363 = arith.addf %362, %361 : vector<2x64xf32>
    %364 = arith.divf %362, %363 : vector<2x64xf32>
    %365 = arith.mulf %356, %11 : vector<2x64xf32>
    %366 = arith.mulf %350, %358 : vector<2x64xf32>
    %367 = arith.addf %365, %366 : vector<2x64xf32>
    %368 = math.tanh %367 : vector<2x64xf32>
    %369 = arith.mulf %364, %368 : vector<2x64xf32>
    %370 = arith.truncf %369 : vector<2x64xf32> to vector<2x64xbf16>
    %c1_i32_91 = arith.constant 1 : i32
    %371 = arith.index_cast %c1_i32_91 : i32 to index
    %c0_92 = arith.constant 0 : index
    %c0_93 = arith.constant 0 : index
    %372 = vector.load %arg10[%371, %c0_92, %c0_93] : memref<8x2x256xf32, #tpu.memory_space<vmem>>, vector<1x2x256xf32>
    %373 = vector.shape_cast %372 : vector<1x2x256xf32> to vector<2x256xf32>
    %cst_94 = arith.constant dense<0.000000e+00> : vector<2x256xf32>
    %374 = tpu.matmul %370, %3, %cst_94 {dimension_numbers = #tpu.dot_dimension_numbers<[1], [0], [0], [1], [0, 0, 1, 1], [], []>} : vector<2x64xbf16>, vector<64x256xbf16>, vector<2x256xf32> -> vector<2x256xf32>
    %375 = arith.addf %373, %374 : vector<2x256xf32>
    %376 = vector.extract_strided_slice %375 {offsets = [0, 0], sizes = [2, 64], strides = [1, 1]} : vector<2x256xf32> to vector<2x64xf32>
    %377 = arith.negf %376 : vector<2x64xf32>
    %378 = math.exp %377 : vector<2x64xf32>
    %cst_95 = arith.constant 1.000000e+00 : f32
    %379 = vector.broadcast %cst_95 : f32 to vector<2x64xf32>
    %380 = arith.addf %379, %378 : vector<2x64xf32>
    %381 = arith.divf %379, %380 : vector<2x64xf32>
    %382 = vector.extract_strided_slice %375 {offsets = [0, 64], sizes = [2, 64], strides = [1, 1]} : vector<2x256xf32> to vector<2x64xf32>
    %383 = arith.negf %382 : vector<2x64xf32>
    %384 = math.exp %383 : vector<2x64xf32>
    %cst_96 = arith.constant 1.000000e+00 : f32
    %385 = vector.broadcast %cst_96 : f32 to vector<2x64xf32>
    %386 = arith.addf %385, %384 : vector<2x64xf32>
    %387 = arith.divf %385, %386 : vector<2x64xf32>
    %388 = vector.extract_strided_slice %375 {offsets = [0, 128], sizes = [2, 64], strides = [1, 1]} : vector<2x256xf32> to vector<2x64xf32>
    %389 = math.tanh %388 : vector<2x64xf32>
    %390 = vector.extract_strided_slice %375 {offsets = [0, 192], sizes = [2, 64], strides = [1, 1]} : vector<2x256xf32> to vector<2x64xf32>
    %391 = arith.negf %390 : vector<2x64xf32>
    %392 = math.exp %391 : vector<2x64xf32>
    %cst_97 = arith.constant 1.000000e+00 : f32
    %393 = vector.broadcast %cst_97 : f32 to vector<2x64xf32>
    %394 = arith.addf %393, %392 : vector<2x64xf32>
    %395 = arith.divf %393, %394 : vector<2x64xf32>
    %396 = arith.mulf %387, %367 : vector<2x64xf32>
    %397 = arith.mulf %381, %389 : vector<2x64xf32>
    %398 = arith.addf %396, %397 : vector<2x64xf32>
    %399 = math.tanh %398 : vector<2x64xf32>
    %400 = arith.mulf %395, %399 : vector<2x64xf32>
    %401 = arith.truncf %400 : vector<2x64xf32> to vector<2x64xbf16>
    %c2_i32_98 = arith.constant 2 : i32
    %402 = arith.index_cast %c2_i32_98 : i32 to index
    %c0_99 = arith.constant 0 : index
    %c0_100 = arith.constant 0 : index
    %403 = vector.load %arg10[%402, %c0_99, %c0_100] : memref<8x2x256xf32, #tpu.memory_space<vmem>>, vector<1x2x256xf32>
    %404 = vector.shape_cast %403 : vector<1x2x256xf32> to vector<2x256xf32>
    %cst_101 = arith.constant dense<0.000000e+00> : vector<2x256xf32>
    %405 = tpu.matmul %401, %3, %cst_101 {dimension_numbers = #tpu.dot_dimension_numbers<[1], [0], [0], [1], [0, 0, 1, 1], [], []>} : vector<2x64xbf16>, vector<64x256xbf16>, vector<2x256xf32> -> vector<2x256xf32>
    %406 = arith.addf %404, %405 : vector<2x256xf32>
    %407 = vector.extract_strided_slice %406 {offsets = [0, 0], sizes = [2, 64], strides = [1, 1]} : vector<2x256xf32> to vector<2x64xf32>
    %408 = arith.negf %407 : vector<2x64xf32>
    %409 = math.exp %408 : vector<2x64xf32>
    %cst_102 = arith.constant 1.000000e+00 : f32
    %410 = vector.broadcast %cst_102 : f32 to vector<2x64xf32>
    %411 = arith.addf %410, %409 : vector<2x64xf32>
    %412 = arith.divf %410, %411 : vector<2x64xf32>
    %413 = vector.extract_strided_slice %406 {offsets = [0, 64], sizes = [2, 64], strides = [1, 1]} : vector<2x256xf32> to vector<2x64xf32>
    %414 = arith.negf %413 : vector<2x64xf32>
    %415 = math.exp %414 : vector<2x64xf32>
    %cst_103 = arith.constant 1.000000e+00 : f32
    %416 = vector.broadcast %cst_103 : f32 to vector<2x64xf32>
    %417 = arith.addf %416, %415 : vector<2x64xf32>
    %418 = arith.divf %416, %417 : vector<2x64xf32>
    %419 = vector.extract_strided_slice %406 {offsets = [0, 128], sizes = [2, 64], strides = [1, 1]} : vector<2x256xf32> to vector<2x64xf32>
    %420 = math.tanh %419 : vector<2x64xf32>
    %421 = vector.extract_strided_slice %406 {offsets = [0, 192], sizes = [2, 64], strides = [1, 1]} : vector<2x256xf32> to vector<2x64xf32>
    %422 = arith.negf %421 : vector<2x64xf32>
    %423 = math.exp %422 : vector<2x64xf32>
    %cst_104 = arith.constant 1.000000e+00 : f32
    %424 = vector.broadcast %cst_104 : f32 to vector<2x64xf32>
    %425 = arith.addf %424, %423 : vector<2x64xf32>
    %426 = arith.divf %424, %425 : vector<2x64xf32>
    %427 = arith.mulf %418, %398 : vector<2x64xf32>
    %428 = arith.mulf %412, %420 : vector<2x64xf32>
    %429 = arith.addf %427, %428 : vector<2x64xf32>
    %430 = math.tanh %429 : vector<2x64xf32>
    %431 = arith.mulf %426, %430 : vector<2x64xf32>
    %432 = arith.truncf %431 : vector<2x64xf32> to vector<2x64xbf16>
    %c3_i32_105 = arith.constant 3 : i32
    %433 = arith.index_cast %c3_i32_105 : i32 to index
    %c0_106 = arith.constant 0 : index
    %c0_107 = arith.constant 0 : index
    %434 = vector.load %arg10[%433, %c0_106, %c0_107] : memref<8x2x256xf32, #tpu.memory_space<vmem>>, vector<1x2x256xf32>
    %435 = vector.shape_cast %434 : vector<1x2x256xf32> to vector<2x256xf32>
    %cst_108 = arith.constant dense<0.000000e+00> : vector<2x256xf32>
    %436 = tpu.matmul %432, %3, %cst_108 {dimension_numbers = #tpu.dot_dimension_numbers<[1], [0], [0], [1], [0, 0, 1, 1], [], []>} : vector<2x64xbf16>, vector<64x256xbf16>, vector<2x256xf32> -> vector<2x256xf32>
    %437 = arith.addf %435, %436 : vector<2x256xf32>
    %438 = vector.extract_strided_slice %437 {offsets = [0, 0], sizes = [2, 64], strides = [1, 1]} : vector<2x256xf32> to vector<2x64xf32>
    %439 = arith.negf %438 : vector<2x64xf32>
    %440 = math.exp %439 : vector<2x64xf32>
    %cst_109 = arith.constant 1.000000e+00 : f32
    %441 = vector.broadcast %cst_109 : f32 to vector<2x64xf32>
    %442 = arith.addf %441, %440 : vector<2x64xf32>
    %443 = arith.divf %441, %442 : vector<2x64xf32>
    %444 = vector.extract_strided_slice %437 {offsets = [0, 64], sizes = [2, 64], strides = [1, 1]} : vector<2x256xf32> to vector<2x64xf32>
    %445 = arith.negf %444 : vector<2x64xf32>
    %446 = math.exp %445 : vector<2x64xf32>
    %cst_110 = arith.constant 1.000000e+00 : f32
    %447 = vector.broadcast %cst_110 : f32 to vector<2x64xf32>
    %448 = arith.addf %447, %446 : vector<2x64xf32>
    %449 = arith.divf %447, %448 : vector<2x64xf32>
    %450 = vector.extract_strided_slice %437 {offsets = [0, 128], sizes = [2, 64], strides = [1, 1]} : vector<2x256xf32> to vector<2x64xf32>
    %451 = math.tanh %450 : vector<2x64xf32>
    %452 = vector.extract_strided_slice %437 {offsets = [0, 192], sizes = [2, 64], strides = [1, 1]} : vector<2x256xf32> to vector<2x64xf32>
    %453 = arith.negf %452 : vector<2x64xf32>
    %454 = math.exp %453 : vector<2x64xf32>
    %cst_111 = arith.constant 1.000000e+00 : f32
    %455 = vector.broadcast %cst_111 : f32 to vector<2x64xf32>
    %456 = arith.addf %455, %454 : vector<2x64xf32>
    %457 = arith.divf %455, %456 : vector<2x64xf32>
    %458 = arith.mulf %449, %429 : vector<2x64xf32>
    %459 = arith.mulf %443, %451 : vector<2x64xf32>
    %460 = arith.addf %458, %459 : vector<2x64xf32>
    %461 = math.tanh %460 : vector<2x64xf32>
    %462 = arith.mulf %457, %461 : vector<2x64xf32>
    %463 = arith.truncf %462 : vector<2x64xf32> to vector<2x64xbf16>
    %c4_i32_112 = arith.constant 4 : i32
    %464 = arith.index_cast %c4_i32_112 : i32 to index
    %c0_113 = arith.constant 0 : index
    %c0_114 = arith.constant 0 : index
    %465 = vector.load %arg10[%464, %c0_113, %c0_114] : memref<8x2x256xf32, #tpu.memory_space<vmem>>, vector<1x2x256xf32>
    %466 = vector.shape_cast %465 : vector<1x2x256xf32> to vector<2x256xf32>
    %cst_115 = arith.constant dense<0.000000e+00> : vector<2x256xf32>
    %467 = tpu.matmul %463, %3, %cst_115 {dimension_numbers = #tpu.dot_dimension_numbers<[1], [0], [0], [1], [0, 0, 1, 1], [], []>} : vector<2x64xbf16>, vector<64x256xbf16>, vector<2x256xf32> -> vector<2x256xf32>
    %468 = arith.addf %466, %467 : vector<2x256xf32>
    %469 = vector.extract_strided_slice %468 {offsets = [0, 0], sizes = [2, 64], strides = [1, 1]} : vector<2x256xf32> to vector<2x64xf32>
    %470 = arith.negf %469 : vector<2x64xf32>
    %471 = math.exp %470 : vector<2x64xf32>
    %cst_116 = arith.constant 1.000000e+00 : f32
    %472 = vector.broadcast %cst_116 : f32 to vector<2x64xf32>
    %473 = arith.addf %472, %471 : vector<2x64xf32>
    %474 = arith.divf %472, %473 : vector<2x64xf32>
    %475 = vector.extract_strided_slice %468 {offsets = [0, 64], sizes = [2, 64], strides = [1, 1]} : vector<2x256xf32> to vector<2x64xf32>
    %476 = arith.negf %475 : vector<2x64xf32>
    %477 = math.exp %476 : vector<2x64xf32>
    %cst_117 = arith.constant 1.000000e+00 : f32
    %478 = vector.broadcast %cst_117 : f32 to vector<2x64xf32>
    %479 = arith.addf %478, %477 : vector<2x64xf32>
    %480 = arith.divf %478, %479 : vector<2x64xf32>
    %481 = vector.extract_strided_slice %468 {offsets = [0, 128], sizes = [2, 64], strides = [1, 1]} : vector<2x256xf32> to vector<2x64xf32>
    %482 = math.tanh %481 : vector<2x64xf32>
    %483 = vector.extract_strided_slice %468 {offsets = [0, 192], sizes = [2, 64], strides = [1, 1]} : vector<2x256xf32> to vector<2x64xf32>
    %484 = arith.negf %483 : vector<2x64xf32>
    %485 = math.exp %484 : vector<2x64xf32>
    %cst_118 = arith.constant 1.000000e+00 : f32
    %486 = vector.broadcast %cst_118 : f32 to vector<2x64xf32>
    %487 = arith.addf %486, %485 : vector<2x64xf32>
    %488 = arith.divf %486, %487 : vector<2x64xf32>
    %489 = arith.mulf %480, %460 : vector<2x64xf32>
    %490 = arith.mulf %474, %482 : vector<2x64xf32>
    %491 = arith.addf %489, %490 : vector<2x64xf32>
    %492 = math.tanh %491 : vector<2x64xf32>
    %493 = arith.mulf %488, %492 : vector<2x64xf32>
    %494 = arith.truncf %493 : vector<2x64xf32> to vector<2x64xbf16>
    %c5_i32_119 = arith.constant 5 : i32
    %495 = arith.index_cast %c5_i32_119 : i32 to index
    %c0_120 = arith.constant 0 : index
    %c0_121 = arith.constant 0 : index
    %496 = vector.load %arg10[%495, %c0_120, %c0_121] : memref<8x2x256xf32, #tpu.memory_space<vmem>>, vector<1x2x256xf32>
    %497 = vector.shape_cast %496 : vector<1x2x256xf32> to vector<2x256xf32>
    %cst_122 = arith.constant dense<0.000000e+00> : vector<2x256xf32>
    %498 = tpu.matmul %494, %3, %cst_122 {dimension_numbers = #tpu.dot_dimension_numbers<[1], [0], [0], [1], [0, 0, 1, 1], [], []>} : vector<2x64xbf16>, vector<64x256xbf16>, vector<2x256xf32> -> vector<2x256xf32>
    %499 = arith.addf %497, %498 : vector<2x256xf32>
    %500 = vector.extract_strided_slice %499 {offsets = [0, 0], sizes = [2, 64], strides = [1, 1]} : vector<2x256xf32> to vector<2x64xf32>
    %501 = arith.negf %500 : vector<2x64xf32>
    %502 = math.exp %501 : vector<2x64xf32>
    %cst_123 = arith.constant 1.000000e+00 : f32
    %503 = vector.broadcast %cst_123 : f32 to vector<2x64xf32>
    %504 = arith.addf %503, %502 : vector<2x64xf32>
    %505 = arith.divf %503, %504 : vector<2x64xf32>
    %506 = vector.extract_strided_slice %499 {offsets = [0, 64], sizes = [2, 64], strides = [1, 1]} : vector<2x256xf32> to vector<2x64xf32>
    %507 = arith.negf %506 : vector<2x64xf32>
    %508 = math.exp %507 : vector<2x64xf32>
    %cst_124 = arith.constant 1.000000e+00 : f32
    %509 = vector.broadcast %cst_124 : f32 to vector<2x64xf32>
    %510 = arith.addf %509, %508 : vector<2x64xf32>
    %511 = arith.divf %509, %510 : vector<2x64xf32>
    %512 = vector.extract_strided_slice %499 {offsets = [0, 128], sizes = [2, 64], strides = [1, 1]} : vector<2x256xf32> to vector<2x64xf32>
    %513 = math.tanh %512 : vector<2x64xf32>
    %514 = vector.extract_strided_slice %499 {offsets = [0, 192], sizes = [2, 64], strides = [1, 1]} : vector<2x256xf32> to vector<2x64xf32>
    %515 = arith.negf %514 : vector<2x64xf32>
    %516 = math.exp %515 : vector<2x64xf32>
    %cst_125 = arith.constant 1.000000e+00 : f32
    %517 = vector.broadcast %cst_125 : f32 to vector<2x64xf32>
    %518 = arith.addf %517, %516 : vector<2x64xf32>
    %519 = arith.divf %517, %518 : vector<2x64xf32>
    %520 = arith.mulf %511, %491 : vector<2x64xf32>
    %521 = arith.mulf %505, %513 : vector<2x64xf32>
    %522 = arith.addf %520, %521 : vector<2x64xf32>
    %523 = math.tanh %522 : vector<2x64xf32>
    %524 = arith.mulf %519, %523 : vector<2x64xf32>
    %525 = arith.truncf %524 : vector<2x64xf32> to vector<2x64xbf16>
    %c6_i32_126 = arith.constant 6 : i32
    %526 = arith.index_cast %c6_i32_126 : i32 to index
    %c0_127 = arith.constant 0 : index
    %c0_128 = arith.constant 0 : index
    %527 = vector.load %arg10[%526, %c0_127, %c0_128] : memref<8x2x256xf32, #tpu.memory_space<vmem>>, vector<1x2x256xf32>
    %528 = vector.shape_cast %527 : vector<1x2x256xf32> to vector<2x256xf32>
    %cst_129 = arith.constant dense<0.000000e+00> : vector<2x256xf32>
    %529 = tpu.matmul %525, %3, %cst_129 {dimension_numbers = #tpu.dot_dimension_numbers<[1], [0], [0], [1], [0, 0, 1, 1], [], []>} : vector<2x64xbf16>, vector<64x256xbf16>, vector<2x256xf32> -> vector<2x256xf32>
    %530 = arith.addf %528, %529 : vector<2x256xf32>
    %531 = vector.extract_strided_slice %530 {offsets = [0, 0], sizes = [2, 64], strides = [1, 1]} : vector<2x256xf32> to vector<2x64xf32>
    %532 = arith.negf %531 : vector<2x64xf32>
    %533 = math.exp %532 : vector<2x64xf32>
    %cst_130 = arith.constant 1.000000e+00 : f32
    %534 = vector.broadcast %cst_130 : f32 to vector<2x64xf32>
    %535 = arith.addf %534, %533 : vector<2x64xf32>
    %536 = arith.divf %534, %535 : vector<2x64xf32>
    %537 = vector.extract_strided_slice %530 {offsets = [0, 64], sizes = [2, 64], strides = [1, 1]} : vector<2x256xf32> to vector<2x64xf32>
    %538 = arith.negf %537 : vector<2x64xf32>
    %539 = math.exp %538 : vector<2x64xf32>
    %cst_131 = arith.constant 1.000000e+00 : f32
    %540 = vector.broadcast %cst_131 : f32 to vector<2x64xf32>
    %541 = arith.addf %540, %539 : vector<2x64xf32>
    %542 = arith.divf %540, %541 : vector<2x64xf32>
    %543 = vector.extract_strided_slice %530 {offsets = [0, 128], sizes = [2, 64], strides = [1, 1]} : vector<2x256xf32> to vector<2x64xf32>
    %544 = math.tanh %543 : vector<2x64xf32>
    %545 = vector.extract_strided_slice %530 {offsets = [0, 192], sizes = [2, 64], strides = [1, 1]} : vector<2x256xf32> to vector<2x64xf32>
    %546 = arith.negf %545 : vector<2x64xf32>
    %547 = math.exp %546 : vector<2x64xf32>
    %cst_132 = arith.constant 1.000000e+00 : f32
    %548 = vector.broadcast %cst_132 : f32 to vector<2x64xf32>
    %549 = arith.addf %548, %547 : vector<2x64xf32>
    %550 = arith.divf %548, %549 : vector<2x64xf32>
    %551 = arith.mulf %542, %522 : vector<2x64xf32>
    %552 = arith.mulf %536, %544 : vector<2x64xf32>
    %553 = arith.addf %551, %552 : vector<2x64xf32>
    %554 = math.tanh %553 : vector<2x64xf32>
    %555 = arith.mulf %550, %554 : vector<2x64xf32>
    %556 = arith.truncf %555 : vector<2x64xf32> to vector<2x64xbf16>
    %c7_i32_133 = arith.constant 7 : i32
    %557 = arith.index_cast %c7_i32_133 : i32 to index
    %c0_134 = arith.constant 0 : index
    %c0_135 = arith.constant 0 : index
    %558 = vector.load %arg10[%557, %c0_134, %c0_135] : memref<8x2x256xf32, #tpu.memory_space<vmem>>, vector<1x2x256xf32>
    %559 = vector.shape_cast %558 : vector<1x2x256xf32> to vector<2x256xf32>
    %cst_136 = arith.constant dense<0.000000e+00> : vector<2x256xf32>
    %560 = tpu.matmul %556, %3, %cst_136 {dimension_numbers = #tpu.dot_dimension_numbers<[1], [0], [0], [1], [0, 0, 1, 1], [], []>} : vector<2x64xbf16>, vector<64x256xbf16>, vector<2x256xf32> -> vector<2x256xf32>
    %561 = arith.addf %559, %560 : vector<2x256xf32>
    %562 = vector.extract_strided_slice %561 {offsets = [0, 0], sizes = [2, 64], strides = [1, 1]} : vector<2x256xf32> to vector<2x64xf32>
    %563 = arith.negf %562 : vector<2x64xf32>
    %564 = math.exp %563 : vector<2x64xf32>
    %cst_137 = arith.constant 1.000000e+00 : f32
    %565 = vector.broadcast %cst_137 : f32 to vector<2x64xf32>
    %566 = arith.addf %565, %564 : vector<2x64xf32>
    %567 = arith.divf %565, %566 : vector<2x64xf32>
    %568 = vector.extract_strided_slice %561 {offsets = [0, 64], sizes = [2, 64], strides = [1, 1]} : vector<2x256xf32> to vector<2x64xf32>
    %569 = arith.negf %568 : vector<2x64xf32>
    %570 = math.exp %569 : vector<2x64xf32>
    %cst_138 = arith.constant 1.000000e+00 : f32
    %571 = vector.broadcast %cst_138 : f32 to vector<2x64xf32>
    %572 = arith.addf %571, %570 : vector<2x64xf32>
    %573 = arith.divf %571, %572 : vector<2x64xf32>
    %574 = vector.extract_strided_slice %561 {offsets = [0, 128], sizes = [2, 64], strides = [1, 1]} : vector<2x256xf32> to vector<2x64xf32>
    %575 = math.tanh %574 : vector<2x64xf32>
    %576 = vector.extract_strided_slice %561 {offsets = [0, 192], sizes = [2, 64], strides = [1, 1]} : vector<2x256xf32> to vector<2x64xf32>
    %577 = arith.negf %576 : vector<2x64xf32>
    %578 = math.exp %577 : vector<2x64xf32>
    %cst_139 = arith.constant 1.000000e+00 : f32
    %579 = vector.broadcast %cst_139 : f32 to vector<2x64xf32>
    %580 = arith.addf %579, %578 : vector<2x64xf32>
    %581 = arith.divf %579, %580 : vector<2x64xf32>
    %582 = arith.mulf %573, %553 : vector<2x64xf32>
    %583 = arith.mulf %567, %575 : vector<2x64xf32>
    %584 = arith.addf %582, %583 : vector<2x64xf32>
    %585 = math.tanh %584 : vector<2x64xf32>
    %586 = arith.mulf %581, %585 : vector<2x64xf32>
    %587 = arith.truncf %586 : vector<2x64xf32> to vector<2x64xbf16>
    %c8_i32_140 = arith.constant 8 : i32
    %588 = arith.extf %587 : vector<2x64xbf16> to vector<2x64xf32>
    %c0_141 = arith.constant 0 : index
    %c0_142 = arith.constant 0 : index
    %589 = vector.load %arg7[%c0_141, %c0_142] : memref<64x5xf32, #tpu.memory_space<vmem>>, vector<64x5xf32>
    %cst_143 = arith.constant dense<0.000000e+00> : vector<2x5xf32>
    %590 = tpu.matmul %588, %589, %cst_143 {dimension_numbers = #tpu.dot_dimension_numbers<[1], [0], [0], [1], [0, 0, 1, 1], [], []>} : vector<2x64xf32>, vector<64x5xf32>, vector<2x5xf32> -> vector<2x5xf32>
    %c0_144 = arith.constant 0 : index
    %c0_145 = arith.constant 0 : index
    %591 = vector.load %arg8[%c0_144, %c0_145] : memref<1x5xf32, #tpu.memory_space<vmem>>, vector<1x5xf32>
    %592 = vector.broadcast %591 : vector<1x5xf32> to vector<2x5xf32>
    %593 = arith.addf %590, %592 : vector<2x5xf32>
    %c0_146 = arith.constant 0 : index
    %c0_147 = arith.constant 0 : index
    %594 = vector.load %arg9[%c0_146, %c0_147] : memref<2x5xf32, #tpu.memory_space<vmem>>, vector<2x5xf32>
    tpu.vector_store %arg9[%c0_146, %c0_147], %593 {strides = array<i32>} : memref<2x5xf32, #tpu.memory_space<vmem>>, vector<2x5xf32>,
    return
  }
}

</mosaic_0001>

<llo_original>
// kernel: weather_rnn_forward.1
$region0: #{weather_rnn_forward.1}
  #allocation0 [shape = 'u32[]', space=smem, size = 0x4, offset = 0x4, fixed_abs, tag = 'smem constant byte address 0x4 - core index']
  #allocation1 [shape = 'u32[72,128]{1,0:T(1,128)}', space=vmem, size = 0x9000, scoped, tag = 'internal scratch']
  #allocation2 [shape = 'f32[8,2,256]{2,1,0:T(2,128)}', space=vmem, size = 0x4000, scoped, tag = 'scratch operand']
  %s0 = inlined_call_operand.vmem [shape: f32[8,2,1], index: 0, kind: input, shape index: {}]
  %s1 = inlined_call_operand.vmem [shape: f32[1,256], index: 1, kind: input, shape index: {}]
  %s2 = inlined_call_operand.vmem [shape: f32[1,256], index: 2, kind: input, shape index: {}]
  %s3 = inlined_call_operand.vmem [shape: bf16[64,256], index: 3, kind: input, shape index: {}]
  %s4 = inlined_call_operand.hbm [shape: bf16[64,256], index: 4, kind: input, shape index: {}]
  %s5 = inlined_call_operand.hbm [shape: bf16[64,256], index: 5, kind: input, shape index: {}]
  %s6 = inlined_call_operand.vmem [shape: f32[1,256], index: 6, kind: input, shape index: {}]
  %s7 = inlined_call_operand.vmem [shape: f32[64,5], index: 7, kind: input, shape index: {}]
  %s8 = inlined_call_operand.vmem [shape: f32[1,5], index: 8, kind: input, shape index: {}]
  %s9 = inlined_call_operand.hbm [shape: f32[2,5], index: 9, kind: output, shape index: {}]
  %s10 = sld [smem:[#allocation0]]
  $region54: #{weather_rnn_forward.1} parent=0
    _
  %s12 = ssub.s32 1, %s10
  %s13 = scalar_select 0, %s12, %s10
  $region1: #{weather_rnn_forward.1} parent=0
    #allocation3 [shape = 'u8[32768]{0}', space=vmem, size = 0x8000, scoped, tag = 'input window, operand 4, single buffered']
    #allocation4 [shape = 's32[1]{0}', space=sflag, size = 0x4, scoped, tag = 'scoped memory for weather_rnn_forward.1']
    #allocation5 [shape = 's32[1]{0}', space=sflag, size = 0x4, scoped, tag = 'scoped memory for weather_rnn_forward.1']
    #allocation6 [shape = 'u8[32768]{0}', space=vmem, size = 0x8000, scoped, tag = 'input window, operand 5, single buffered']
    #allocation7 [shape = 's32[1]{0}', space=sflag, size = 0x4, scoped, tag = 'scoped memory for weather_rnn_forward.1']
    #allocation8 [shape = 'u8[1024]{0}', space=vmem, size = 0x400, scoped, tag = 'output window, operand 0, single buffered']
    %14 = vsyncpa [#allocation4], 0
    %15 = vsyncpa [#allocation7], 0
    %16 = vsyncpa [#allocation5], 0
    // Predicated region
    $region2: #{weather_rnn_forward.1} parent=1 // pred_check
      _
    $region3: #{weather_rnn_forward.1} parent=1 // pred_check_branch
      %18 = sbr.rel (0) target = $region5
    $region4: #{weather_rnn_forward.1} parent=1 // pred_region
      _
    $region5: #{weather_rnn_forward.1} parent=1 // pred_fallthru
      _
    // Predicated region
    $region6: #{weather_rnn_forward.1} parent=1 // pred_check
      _
    $region7: #{weather_rnn_forward.1} parent=1 // pred_check_branch
      %20 = sbr.rel (0) target = $region9
    $region8: #{weather_rnn_forward.1} parent=1 // pred_region
      _
    $region9: #{weather_rnn_forward.1} parent=1 // pred_fallthru
      _
    // Predicated region
    $region10: #{weather_rnn_forward.1} parent=1 // pred_check
      _
    $region11: #{weather_rnn_forward.1} parent=1 // pred_check_branch
      %22 = sbr.rel (0) target = $region13
    $region12: #{weather_rnn_forward.1} parent=1 // pred_region
      _
    $region13: #{weather_rnn_forward.1} parent=1 // pred_fallthru
      _
    // Predicated region
    $region14: #{weather_rnn_forward.1} parent=1 // pred_check
      _
    $region15: #{weather_rnn_forward.1} parent=1 // pred_check_branch
      %24 = sbr.rel (0) target = $region17
    $region16: #{weather_rnn_forward.1} parent=1 // pred_region
      _
    $region17: #{weather_rnn_forward.1} parent=1 // pred_fallthru
      _
    // Predicated region
    $region18: #{weather_rnn_forward.1} parent=1 // pred_check
      _
    $region19: #{weather_rnn_forward.1} parent=1 // pred_check_branch
      %26 = sbr.rel (0) target = $region21
    $region20: #{weather_rnn_forward.1} parent=1 // pred_region
      %28 = vsyncadd [#allocation4], 0
      %s29 = sshll.u32 %s4, 4
      %s30 = int_to_ptr.hbm [resolvable:$true] %s29
      %s31 = sshll.u32 [#allocation3], 4
      %s32 = int_to_ptr.vmem [resolvable:$true] %s31
      %37 = dma.hbm_to_vmem [thread:$0]  %s30, 1024, %s32, [#allocation4], 128, 128, 8
    $region21: #{weather_rnn_forward.1} parent=1 // pred_fallthru
      _
    // Predicated region
    $region22: #{weather_rnn_forward.1} parent=1 // pred_check
      _
    $region23: #{weather_rnn_forward.1} parent=1 // pred_check_branch
      %39 = sbr.rel (0) target = $region25
    $region24: #{weather_rnn_forward.1} parent=1 // pred_region
      %41 = vsyncadd [#allocation7], 0
      %s42 = sshll.u32 %s5, 4
      %s43 = int_to_ptr.hbm [resolvable:$true] %s42
      %s44 = sshll.u32 [#allocation6], 4
      %s45 = int_to_ptr.vmem [resolvable:$true] %s44
      %50 = dma.hbm_to_vmem [thread:$0]  %s43, 1024, %s45, [#allocation7], 128, 128, 8
    $region25: #{weather_rnn_forward.1} parent=1 // pred_fallthru
      _
    // Predicated region
    $region26: #{weather_rnn_forward.1} parent=1 // pred_check
      _
    $region27: #{weather_rnn_forward.1} parent=1 // pred_check_branch
      %52 = sbr.rel (0) target = $region29
    $region28: #{weather_rnn_forward.1} parent=1 // pred_region
      _
    $region29: #{weather_rnn_forward.1} parent=1 // pred_fallthru
      _
    // Predicated region
    $region30: #{weather_rnn_forward.1} parent=1 // pred_check
      _
    $region31: #{weather_rnn_forward.1} parent=1 // pred_check_branch
      %54 = sbr.rel (0) target = $region33
    $region32: #{weather_rnn_forward.1} parent=1 // pred_region
      _
    $region33: #{weather_rnn_forward.1} parent=1 // pred_fallthru
      _
    // Predicated region
    $region34: #{weather_rnn_forward.1} parent=1 // pred_check
      _
    $region35: #{weather_rnn_forward.1} parent=1 // pred_check_branch
      %56 = sbr.rel (0) target = $region37
    $region36: #{weather_rnn_forward.1} parent=1 // pred_region
      _
    $region37: #{weather_rnn_forward.1} parent=1 // pred_fallthru
      _
    // Predicated region
    $region38: #{weather_rnn_forward.1} parent=1 // pred_check
      _
    $region39: #{weather_rnn_forward.1} parent=1 // pred_check_branch
      %58 = sbr.rel (0) target = $region41
    $region40: #{weather_rnn_forward.1} parent=1 // pred_region
      %60 = dma.done [#allocation4], 1024
    $region41: #{weather_rnn_forward.1} parent=1 // pred_fallthru
      _
    // Predicated region
    $region42: #{weather_rnn_forward.1} parent=1 // pred_check
      _
    $region43: #{weather_rnn_forward.1} parent=1 // pred_check_branch
      %62 = sbr.rel (0) target = $region45
    $region44: #{weather_rnn_forward.1} parent=1 // pred_region
      %64 = dma.done [#allocation7], 1024
    $region45: #{weather_rnn_forward.1} parent=1 // pred_fallthru
      _
    %v66 = vld [vmem:[%s1] sm:$0x3]
    %v67 = vld [vmem:[%s3] sm:$0xff]
    %v68 = vld [vmem:[%s3 + $0x8] sm:$0xff]
    %v69 = vld [vmem:[%s3 + $0x10] sm:$0xff]
    %v70 = vld [vmem:[%s3 + $0x18] sm:$0xff]
    %v71 = vld [vmem:[%s3 + $0x20] sm:$0xff]
    %v72 = vld [vmem:[%s3 + $0x28] sm:$0xff]
    %v73 = vld [vmem:[%s3 + $0x30] sm:$0xff]
    %v74 = vld [vmem:[%s3 + $0x38] sm:$0xff]
    %v75 = vld [vmem:[#allocation3] sm:$0xff]
    %v76 = vld [vmem:[#allocation3 + $0x8] sm:$0xff]
    %v77 = vld [vmem:[#allocation3 + $0x10] sm:$0xff]
    %v78 = vld [vmem:[#allocation3 + $0x18] sm:$0xff]
    %v79 = vld [vmem:[#allocation3 + $0x20] sm:$0xff]
    %v80 = vld [vmem:[#allocation3 + $0x28] sm:$0xff]
    %v81 = vld [vmem:[#allocation3 + $0x30] sm:$0xff]
    %v82 = vld [vmem:[#allocation3 + $0x38] sm:$0xff]
    %v83 = vld [vmem:[#allocation6] sm:$0xff]
    %v84 = vld [vmem:[#allocation6 + $0x8] sm:$0xff]
    %v85 = vld [vmem:[#allocation6 + $0x10] sm:$0xff]
    %v86 = vld [vmem:[#allocation6 + $0x18] sm:$0xff]
    %v87 = vld [vmem:[#allocation6 + $0x20] sm:$0xff]
    %v88 = vld [vmem:[#allocation6 + $0x28] sm:$0xff]
    %v89 = vld [vmem:[#allocation6 + $0x30] sm:$0xff]
    %v90 = vld [vmem:[#allocation6 + $0x38] sm:$0xff]
    %v91 = vld [vmem:[%s2] sm:$0x3]
    %v93 = vperm.slane %v91, 0
    %v94 = vperm.slane %v91, 1
    %v97 = vld [vmem:[%s6] sm:$0x3]
    %v99 = vperm.slane %v97, 0
    %v100 = vperm.slane %v97, 1
    %v103 = vld [vmem:[%s0] sm:$0x3]
    %105 = vset.pattern.permute.xlu0 0
    %106 = vperm.xlu0 %105, %v103
    %v107 = vpop.permute.xlu0 %106
    %v110 = vperm.slane %v66, 0
    %v111 = vperm.slane %v66, 1
    %v114 = vmul.f32 %v107, %v110
    %v115 = vmul.f32 %v107, %v111
    %v116 = vadd.f32 %v114, %v93
    %v117 = vadd.f32 %v115, %v94
    %v126 = vunpack.c.l.b16 %v67
    %v127 = vunpack.c.h.b16 %v67
    %v128 = vunpack.c.l.b16 %v68
    %v129 = vunpack.c.h.b16 %v68
    %v130 = vunpack.c.l.b16 %v69
    %v131 = vunpack.c.h.b16 %v69
    %v132 = vunpack.c.l.b16 %v70
    %v133 = vunpack.c.h.b16 %v70
    %v134 = vunpack.c.l.b16 %v71
    %v135 = vunpack.c.h.b16 %v71
    %v136 = vunpack.c.l.b16 %v72
    %v137 = vunpack.c.h.b16 %v72
    %v138 = vunpack.c.l.b16 %v73
    %v139 = vunpack.c.h.b16 %v73
    %v140 = vunpack.c.l.b16 %v74
    %v141 = vunpack.c.h.b16 %v74
    %v142 = vpack.c.b16 %v128, %v126
    %v143 = vpack.c.b16 %v129, %v127
    %v144 = vpack.c.b16 %v132, %v130
    %v145 = vpack.c.b16 %v133, %v131
    %v146 = vpack.c.b16 %v136, %v134
    %v147 = vpack.c.b16 %v137, %v135
    %v148 = vpack.c.b16 %v140, %v138
    %v149 = vpack.c.b16 %v141, %v139
    %vm158 = vcmask 523264
    %v160 = vsel %vm158, 0, 0
    %162 = vmatpush.bf16.msra.mxu0 0
    %163 = vmatpush.bf16.msra.mxu0 0
    %164 = vmatpush.bf16.msra.mxu0 0
    %165 = vmatpush.bf16.msra.mxu0 0
    %166 = vmatpush.bf16.msra.mxu0 %v148
    %167 = vmatpush.bf16.msra.mxu0 %v146
    %168 = vmatpush.bf16.msra.mxu0 %v144
    %169 = vmatpush.bf16.msra.mxu0 %v142
    %170 = vmatmul.bf16.gmra.mxu0 %v160
    %v171 = vpop.f32.mrf.mxu0
    %v172 = vadd.f32 0.0, %v171
    %v173 = vpop.f32.mrf.mxu0
    %174 = vdwg.mxu0
    %175 = vmatpush.bf16.msra.mxu0 0
    %176 = vmatpush.bf16.msra.mxu0 0
    %177 = vmatpush.bf16.msra.mxu0 0
    %178 = vmatpush.bf16.msra.mxu0 0
    %179 = vmatpush.bf16.msra.mxu0 %v149
    %180 = vmatpush.bf16.msra.mxu0 %v147
    %181 = vmatpush.bf16.msra.mxu0 %v145
    %182 = vmatpush.bf16.msra.mxu0 %v143
    %183 = vmatmul.bf16.gmra.mxu0 %v160
    %v184 = vpop.f32.mrf.mxu0
    %v185 = vadd.f32 0.0, %v184
    %v186 = vpop.f32.mrf.mxu0
    %187 = vdwg.mxu0
    %v188 = vadd.f32 %v116, %v172
    %v189 = vadd.f32 %v117, %v185
    %v190 = vxor.u32 %v188, 2147483648
    %v191 = vmul.f32 %v190, 1.442695
    %v192 = vpow.pop %v191
    %v193 = vadd.f32 %v192, 1.0
    %v194 = vrcp.pop %v193
    %v195 = vmul.f32 %v193, %v194
    %v196 = vsub.f32 1.0, %v195
    %v197 = vmul.f32 %v194, %v196
    %v198 = vadd.f32 %v194, %v197
    %vm199 = vweird.f32 %v193
    %vm200 = vweird.f32 %v194
    %vm201 = vmor %vm199, %vm200
    %v202 = vsel %vm201, %v194, %v198
    %v203 = vand.u32 2147483647, %v193
    %vm204 = vcmp.eq.f32.partialorder %v203, 8.507059e+37
    %v205 = vand.u32 %v193, 2147483648
    %v206 = vor.u32 1.1754944e-38, %v205
    %v207 = vsel %vm204, %v206, %v202
    %v208 = vmul.f32 1.0, %v207
    %v209 = vtanh.pop %v189
    %v210 = vxor.u32 %v189, 2147483648
    %v211 = vmul.f32 %v210, 1.442695
    %v212 = vpow.pop %v211
    %v213 = vadd.f32 %v212, 1.0
    %v214 = vrcp.pop %v213
    %v215 = vmul.f32 %v213, %v214
    %v216 = vsub.f32 1.0, %v215
    %v217 = vmul.f32 %v214, %v216
    %v218 = vadd.f32 %v214, %v217
    %vm219 = vweird.f32 %v213
    %vm220 = vweird.f32 %v214
    %vm221 = vmor %vm219, %vm220
    %v222 = vsel %vm221, %v214, %v218
    %v223 = vand.u32 2147483647, %v213
    %vm224 = vcmp.eq.f32.partialorder %v223, 8.507059e+37
    %v225 = vand.u32 %v213, 2147483648
    %v226 = vor.u32 1.1754944e-38, %v225
    %v227 = vsel %vm224, %v226, %v222
    %v228 = vmul.f32 1.0, %v227
    %v229 = vmul.f32 %v208, 0.0
    %v230 = vmul.f32 %v208, %v209
    %232 = vrot.lane.b32.xlu0 %v230, 64
    %v233 = vpop.permute.xlu0 %232
    %v235 = vadd.f32 %v229, %v233
    %v236 = vtanh.pop %v235
    %v237 = vmul.f32 %v228, %v236
    %v238 = vpack.c.bf16 %v237, %v237
    %240 = vrot.lane.b32.xlu0 %v238, 64
    %v241 = vpop.permute.xlu0 %240
    %v250 = vunpack.c.l.b16 %v75
    %v251 = vunpack.c.h.b16 %v75
    %v252 = vunpack.c.l.b16 %v76
    %v253 = vunpack.c.h.b16 %v76
    %v254 = vunpack.c.l.b16 %v77
    %v255 = vunpack.c.h.b16 %v77
    %v256 = vunpack.c.l.b16 %v78
    %v257 = vunpack.c.h.b16 %v78
    %v258 = vunpack.c.l.b16 %v79
    %v259 = vunpack.c.h.b16 %v79
    %v260 = vunpack.c.l.b16 %v80
    %v261 = vunpack.c.h.b16 %v80
    %v262 = vunpack.c.l.b16 %v81
    %v263 = vunpack.c.h.b16 %v81
    %v264 = vunpack.c.l.b16 %v82
    %v265 = vunpack.c.h.b16 %v82
    %v266 = vpack.c.b16 %v252, %v250
    %v267 = vpack.c.b16 %v253, %v251
    %v268 = vpack.c.b16 %v256, %v254
    %v269 = vpack.c.b16 %v257, %v255
    %v270 = vpack.c.b16 %v260, %v258
    %v271 = vpack.c.b16 %v261, %v259
    %v272 = vpack.c.b16 %v264, %v262
    %v273 = vpack.c.b16 %v265, %v263
    %v283 = vsel %vm158, %v241, 0
    %285 = vmatpush.bf16.msra.mxu0 0
    %286 = vmatpush.bf16.msra.mxu0 0
    %287 = vmatpush.bf16.msra.mxu0 0
    %288 = vmatpush.bf16.msra.mxu0 0
    %289 = vmatpush.bf16.msra.mxu0 %v272
    %290 = vmatpush.bf16.msra.mxu0 %v270
    %291 = vmatpush.bf16.msra.mxu0 %v268
    %292 = vmatpush.bf16.msra.mxu0 %v266
    %293 = vmatmul.bf16.gmra.mxu0 %v283
    %v294 = vpop.f32.mrf.mxu0
    %v295 = vadd.f32 %v99, %v294
    %v296 = vpop.f32.mrf.mxu0
    %297 = vdwg.mxu0
    %298 = vmatpush.bf16.msra.mxu0 0
    %299 = vmatpush.bf16.msra.mxu0 0
    %300 = vmatpush.bf16.msra.mxu0 0
    %301 = vmatpush.bf16.msra.mxu0 0
    %302 = vmatpush.bf16.msra.mxu0 %v273
    %303 = vmatpush.bf16.msra.mxu0 %v271
    %304 = vmatpush.bf16.msra.mxu0 %v269
    %305 = vmatpush.bf16.msra.mxu0 %v267
    %306 = vmatmul.bf16.gmra.mxu0 %v283
    %v307 = vpop.f32.mrf.mxu0
    %v308 = vadd.f32 %v100, %v307
    %v309 = vpop.f32.mrf.mxu0
    %310 = vdwg.mxu0
    %v313 = vrot.slane %v308, 6
    %vm314 = vcmask 1041408
    %v315 = vsel %vm314, %v295, %v313
    %317 = vst [vmem:[#allocation2] sm:$0xf] %v315
    %s318 = scalar_lea.vmem %s0, 2
    %v319 = vld [vmem:[%s318] sm:$0x3]
    %321 = vset.pattern.permute.xlu0 0
    %322 = vperm.xlu0 %321, %v319
    %v323 = vpop.permute.xlu0 %322
    %v325 = vmul.f32 %v323, %v110
    %v326 = vmul.f32 %v323, %v111
    %v327 = vadd.f32 %v325, %v93
    %v328 = vadd.f32 %v326, %v94
    %329 = vmatpush.bf16.msra.mxu0 0
    %330 = vmatpush.bf16.msra.mxu0 0
    %331 = vmatpush.bf16.msra.mxu0 0
    %332 = vmatpush.bf16.msra.mxu0 0
    %333 = vmatpush.bf16.msra.mxu0 %v148
    %334 = vmatpush.bf16.msra.mxu0 %v146
    %335 = vmatpush.bf16.msra.mxu0 %v144
    %336 = vmatpush.bf16.msra.mxu0 %v142
    %337 = vmatmul.bf16.gmra.mxu0 %v283
    %v338 = vpop.f32.mrf.mxu0
    %v339 = vadd.f32 0.0, %v338
    %v340 = vpop.f32.mrf.mxu0
    %341 = vdwg.mxu0
    %342 = vmatpush.bf16.msra.mxu0 0
    %343 = vmatpush.bf16.msra.mxu0 0
    %344 = vmatpush.bf16.msra.mxu0 0
    %345 = vmatpush.bf16.msra.mxu0 0
    %346 = vmatpush.bf16.msra.mxu0 %v149
    %347 = vmatpush.bf16.msra.mxu0 %v147
    %348 = vmatpush.bf16.msra.mxu0 %v145
    %349 = vmatpush.bf16.msra.mxu0 %v143
    %350 = vmatmul.bf16.gmra.mxu0 %v283
    %v351 = vpop.f32.mrf.mxu0
    %v352 = vadd.f32 0.0, %v351
    %v353 = vpop.f32.mrf.mxu0
    %354 = vdwg.mxu0
    %v355 = vadd.f32 %v327, %v339
    %v356 = vadd.f32 %v328, %v352
    %v357 = vxor.u32 %v355, 2147483648
    %v358 = vmul.f32 %v357, 1.442695
    %v359 = vpow.pop %v358
    %v360 = vadd.f32 %v359, 1.0
    %v361 = vrcp.pop %v360
    %v362 = vmul.f32 %v360, %v361
    %v363 = vsub.f32 1.0, %v362
    %v364 = vmul.f32 %v361, %v363
    %v365 = vadd.f32 %v361, %v364
    %vm366 = vweird.f32 %v360
    %vm367 = vweird.f32 %v361
    %vm368 = vmor %vm366, %vm367
    %v369 = vsel %vm368, %v361, %v365
    %v370 = vand.u32 2147483647, %v360
    %vm371 = vcmp.eq.f32.partialorder %v370, 8.507059e+37
    %v372 = vand.u32 %v360, 2147483648
    %v373 = vor.u32 1.1754944e-38, %v372
    %v374 = vsel %vm371, %v373, %v369
    %v375 = vmul.f32 1.0, %v374
    %v376 = vtanh.pop %v356
    %v377 = vxor.u32 %v356, 2147483648
    %v378 = vmul.f32 %v377, 1.442695
    %v379 = vpow.pop %v378
    %v380 = vadd.f32 %v379, 1.0
    %v381 = vrcp.pop %v380
    %v382 = vmul.f32 %v380, %v381
    %v383 = vsub.f32 1.0, %v382
    %v384 = vmul.f32 %v381, %v383
    %v385 = vadd.f32 %v381, %v384
    %vm386 = vweird.f32 %v380
    %vm387 = vweird.f32 %v381
    %vm388 = vmor %vm386, %vm387
    %v389 = vsel %vm388, %v381, %v385
    %v390 = vand.u32 2147483647, %v380
    %vm391 = vcmp.eq.f32.partialorder %v390, 8.507059e+37
    %v392 = vand.u32 %v380, 2147483648
    %v393 = vor.u32 1.1754944e-38, %v392
    %v394 = vsel %vm391, %v393, %v389
    %v395 = vmul.f32 1.0, %v394
    %v396 = vmul.f32 %v375, %v235
    %v397 = vmul.f32 %v375, %v376
    %399 = vrot.lane.b32.xlu0 %v397, 64
    %v400 = vpop.permute.xlu0 %399
    %v402 = vadd.f32 %v396, %v400
    %v403 = vtanh.pop %v402
    %v404 = vmul.f32 %v395, %v403
    %v405 = vpack.c.bf16 %v404, %v404
    %407 = vrot.lane.b32.xlu0 %v405, 64
    %v408 = vpop.permute.xlu0 %407
    %v410 = vsel %vm158, %v408, 0
    %412 = vmatpush.bf16.msra.mxu0 0
    %413 = vmatpush.bf16.msra.mxu0 0
    %414 = vmatpush.bf16.msra.mxu0 0
    %415 = vmatpush.bf16.msra.mxu0 0
    %416 = vmatpush.bf16.msra.mxu0 %v272
    %417 = vmatpush.bf16.msra.mxu0 %v270
    %418 = vmatpush.bf16.msra.mxu0 %v268
    %419 = vmatpush.bf16.msra.mxu0 %v266
    %420 = vmatmul.bf16.gmra.mxu0 %v410
    %v421 = vpop.f32.mrf.mxu0
    %v422 = vadd.f32 %v99, %v421
    %v423 = vpop.f32.mrf.mxu0
    %424 = vdwg.mxu0
    %425 = vmatpush.bf16.msra.mxu0 0
    %426 = vmatpush.bf16.msra.mxu0 0
    %427 = vmatpush.bf16.msra.mxu0 0
    %428 = vmatpush.bf16.msra.mxu0 0
    %429 = vmatpush.bf16.msra.mxu0 %v273
    %430 = vmatpush.bf16.msra.mxu0 %v271
    %431 = vmatpush.bf16.msra.mxu0 %v269
    %432 = vmatpush.bf16.msra.mxu0 %v267
    %433 = vmatmul.bf16.gmra.mxu0 %v410
    %v434 = vpop.f32.mrf.mxu0
    %v435 = vadd.f32 %v100, %v434
    %v436 = vpop.f32.mrf.mxu0
    %437 = vdwg.mxu0
    %v440 = vrot.slane %v435, 6
    %v441 = vsel %vm314, %v422, %v440
    %s443 = scalar_lea.vmem [#allocation2], 4
    %444 = vst [vmem:[%s443] sm:$0xf] %v441
    %s445 = scalar_lea.vmem %s0, 4
    %v446 = vld [vmem:[%s445] sm:$0x3]
    %448 = vset.pattern.permute.xlu0 0
    %449 = vperm.xlu0 %448, %v446
    %v450 = vpop.permute.xlu0 %449
    %v452 = vmul.f32 %v450, %v110
    %v453 = vmul.f32 %v450, %v111
    %v454 = vadd.f32 %v452, %v93
    %v455 = vadd.f32 %v453, %v94
    %456 = vmatpush.bf16.msra.mxu0 0
    %457 = vmatpush.bf16.msra.mxu0 0
    %458 = vmatpush.bf16.msra.mxu0 0
    %459 = vmatpush.bf16.msra.mxu0 0
    %460 = vmatpush.bf16.msra.mxu0 %v148
    %461 = vmatpush.bf16.msra.mxu0 %v146
    %462 = vmatpush.bf16.msra.mxu0 %v144
    %463 = vmatpush.bf16.msra.mxu0 %v142
    %464 = vmatmul.bf16.gmra.mxu0 %v410
    %v465 = vpop.f32.mrf.mxu0
    %v466 = vadd.f32 0.0, %v465
    %v467 = vpop.f32.mrf.mxu0
    %468 = vdwg.mxu0
    %469 = vmatpush.bf16.msra.mxu0 0
    %470 = vmatpush.bf16.msra.mxu0 0
    %471 = vmatpush.bf16.msra.mxu0 0
    %472 = vmatpush.bf16.msra.mxu0 0
    %473 = vmatpush.bf16.msra.mxu0 %v149
    %474 = vmatpush.bf16.msra.mxu0 %v147
    %475 = vmatpush.bf16.msra.mxu0 %v145
    %476 = vmatpush.bf16.msra.mxu0 %v143
    %477 = vmatmul.bf16.gmra.mxu0 %v410
    %v478 = vpop.f32.mrf.mxu0
    %v479 = vadd.f32 0.0, %v478
    %v480 = vpop.f32.mrf.mxu0
    %481 = vdwg.mxu0
    %v482 = vadd.f32 %v454, %v466
    %v483 = vadd.f32 %v455, %v479
    %v484 = vxor.u32 %v482, 2147483648
    %v485 = vmul.f32 %v484, 1.442695
    %v486 = vpow.pop %v485
    %v487 = vadd.f32 %v486, 1.0
    %v488 = vrcp.pop %v487
    %v489 = vmul.f32 %v487, %v488
    %v490 = vsub.f32 1.0, %v489
    %v491 = vmul.f32 %v488, %v490
    %v492 = vadd.f32 %v488, %v491
    %vm493 = vweird.f32 %v487
    %vm494 = vweird.f32 %v488
    %vm495 = vmor %vm493, %vm494
    %v496 = vsel %vm495, %v488, %v492
    %v497 = vand.u32 2147483647, %v487
    %vm498 = vcmp.eq.f32.partialorder %v497, 8.507059e+37
    %v499 = vand.u32 %v487, 2147483648
    %v500 = vor.u32 1.1754944e-38, %v499
    %v501 = vsel %vm498, %v500, %v496
    %v502 = vmul.f32 1.0, %v501
    %v503 = vtanh.pop %v483
    %v504 = vxor.u32 %v483, 2147483648
    %v505 = vmul.f32 %v504, 1.442695
    %v506 = vpow.pop %v505
    %v507 = vadd.f32 %v506, 1.0
    %v508 = vrcp.pop %v507
    %v509 = vmul.f32 %v507, %v508
    %v510 = vsub.f32 1.0, %v509
    %v511 = vmul.f32 %v508, %v510
    %v512 = vadd.f32 %v508, %v511
    %vm513 = vweird.f32 %v507
    %vm514 = vweird.f32 %v508
    %vm515 = vmor %vm513, %vm514
    %v516 = vsel %vm515, %v508, %v512
    %v517 = vand.u32 2147483647, %v507
    %vm518 = vcmp.eq.f32.partialorder %v517, 8.507059e+37
    %v519 = vand.u32 %v507, 2147483648
    %v520 = vor.u32 1.1754944e-38, %v519
    %v521 = vsel %vm518, %v520, %v516
    %v522 = vmul.f32 1.0, %v521
    %v523 = vmul.f32 %v502, %v402
    %v524 = vmul.f32 %v502, %v503
    %526 = vrot.lane.b32.xlu0 %v524, 64
    %v527 = vpop.permute.xlu0 %526
    %v529 = vadd.f32 %v523, %v527
    %v530 = vtanh.pop %v529
    %v531 = vmul.f32 %v522, %v530
    %v532 = vpack.c.bf16 %v531, %v531
    %534 = vrot.lane.b32.xlu0 %v532, 64
    %v535 = vpop.permute.xlu0 %534
    %v537 = vsel %vm158, %v535, 0
    %539 = vmatpush.bf16.msra.mxu0 0
    %540 = vmatpush.bf16.msra.mxu0 0
    %541 = vmatpush.bf16.msra.mxu0 0
    %542 = vmatpush.bf16.msra.mxu0 0
    %543 = vmatpush.bf16.msra.mxu0 %v272
    %544 = vmatpush.bf16.msra.mxu0 %v270
    %545 = vmatpush.bf16.msra.mxu0 %v268
    %546 = vmatpush.bf16.msra.mxu0 %v266
    %547 = vmatmul.bf16.gmra.mxu0 %v537
    %v548 = vpop.f32.mrf.mxu0
    %v549 = vadd.f32 %v99, %v548
    %v550 = vpop.f32.mrf.mxu0
    %551 = vdwg.mxu0
    %552 = vmatpush.bf16.msra.mxu0 0
    %553 = vmatpush.bf16.msra.mxu0 0
    %554 = vmatpush.bf16.msra.mxu0 0
    %555 = vmatpush.bf16.msra.mxu0 0
    %556 = vmatpush.bf16.msra.mxu0 %v273
    %557 = vmatpush.bf16.msra.mxu0 %v271
    %558 = vmatpush.bf16.msra.mxu0 %v269
    %559 = vmatpush.bf16.msra.mxu0 %v267
    %560 = vmatmul.bf16.gmra.mxu0 %v537
    %v561 = vpop.f32.mrf.mxu0
    %v562 = vadd.f32 %v100, %v561
    %v563 = vpop.f32.mrf.mxu0
    %564 = vdwg.mxu0
    %v567 = vrot.slane %v562, 6
    %v568 = vsel %vm314, %v549, %v567
    %s570 = scalar_lea.vmem [#allocation2], 8
    %571 = vst [vmem:[%s570] sm:$0xf] %v568
    %s572 = scalar_lea.vmem %s0, 6
    %v573 = vld [vmem:[%s572] sm:$0x3]
    %575 = vset.pattern.permute.xlu0 0
    %576 = vperm.xlu0 %575, %v573
    %v577 = vpop.permute.xlu0 %576
    %v579 = vmul.f32 %v577, %v110
    %v580 = vmul.f32 %v577, %v111
    %v581 = vadd.f32 %v579, %v93
    %v582 = vadd.f32 %v580, %v94
    %583 = vmatpush.bf16.msra.mxu0 0
    %584 = vmatpush.bf16.msra.mxu0 0
    %585 = vmatpush.bf16.msra.mxu0 0
    %586 = vmatpush.bf16.msra.mxu0 0
    %587 = vmatpush.bf16.msra.mxu0 %v148
    %588 = vmatpush.bf16.msra.mxu0 %v146
    %589 = vmatpush.bf16.msra.mxu0 %v144
    %590 = vmatpush.bf16.msra.mxu0 %v142
    %591 = vmatmul.bf16.gmra.mxu0 %v537
    %v592 = vpop.f32.mrf.mxu0
    %v593 = vadd.f32 0.0, %v592
    %v594 = vpop.f32.mrf.mxu0
    %595 = vdwg.mxu0
    %596 = vmatpush.bf16.msra.mxu0 0
    %597 = vmatpush.bf16.msra.mxu0 0
    %598 = vmatpush.bf16.msra.mxu0 0
    %599 = vmatpush.bf16.msra.mxu0 0
    %600 = vmatpush.bf16.msra.mxu0 %v149
    %601 = vmatpush.bf16.msra.mxu0 %v147
    %602 = vmatpush.bf16.msra.mxu0 %v145
    %603 = vmatpush.bf16.msra.mxu0 %v143
    %604 = vmatmul.bf16.gmra.mxu0 %v537
    %v605 = vpop.f32.mrf.mxu0
    %v606 = vadd.f32 0.0, %v605
    %v607 = vpop.f32.mrf.mxu0
    %608 = vdwg.mxu0
    %v609 = vadd.f32 %v581, %v593
    %v610 = vadd.f32 %v582, %v606
    %v611 = vxor.u32 %v609, 2147483648
    %v612 = vmul.f32 %v611, 1.442695
    %v613 = vpow.pop %v612
    %v614 = vadd.f32 %v613, 1.0
    %v615 = vrcp.pop %v614
    %v616 = vmul.f32 %v614, %v615
    %v617 = vsub.f32 1.0, %v616
    %v618 = vmul.f32 %v615, %v617
    %v619 = vadd.f32 %v615, %v618
    %vm620 = vweird.f32 %v614
    %vm621 = vweird.f32 %v615
    %vm622 = vmor %vm620, %vm621
    %v623 = vsel %vm622, %v615, %v619
    %v624 = vand.u32 2147483647, %v614
    %vm625 = vcmp.eq.f32.partialorder %v624, 8.507059e+37
    %v626 = vand.u32 %v614, 2147483648
    %v627 = vor.u32 1.1754944e-38, %v626
    %v628 = vsel %vm625, %v627, %v623
    %v629 = vmul.f32 1.0, %v628
    %v630 = vtanh.pop %v610
    %v631 = vxor.u32 %v610, 2147483648
    %v632 = vmul.f32 %v631, 1.442695
    %v633 = vpow.pop %v632
    %v634 = vadd.f32 %v633, 1.0
    %v635 = vrcp.pop %v634
    %v636 = vmul.f32 %v634, %v635
    %v637 = vsub.f32 1.0, %v636
    %v638 = vmul.f32 %v635, %v637
    %v639 = vadd.f32 %v635, %v638
    %vm640 = vweird.f32 %v634
    %vm641 = vweird.f32 %v635
    %vm642 = vmor %vm640, %vm641
    %v643 = vsel %vm642, %v635, %v639
    %v644 = vand.u32 2147483647, %v634
    %vm645 = vcmp.eq.f32.partialorder %v644, 8.507059e+37
    %v646 = vand.u32 %v634, 2147483648
    %v647 = vor.u32 1.1754944e-38, %v646
    %v648 = vsel %vm645, %v647, %v643
    %v649 = vmul.f32 1.0, %v648
    %v650 = vmul.f32 %v629, %v529
    %v651 = vmul.f32 %v629, %v630
    %653 = vrot.lane.b32.xlu0 %v651, 64
    %v654 = vpop.permute.xlu0 %653
    %v656 = vadd.f32 %v650, %v654
    %v657 = vtanh.pop %v656
    %v658 = vmul.f32 %v649, %v657
    %v659 = vpack.c.bf16 %v658, %v658
    %661 = vrot.lane.b32.xlu0 %v659, 64
    %v662 = vpop.permute.xlu0 %661
    %v664 = vsel %vm158, %v662, 0
    %666 = vmatpush.bf16.msra.mxu0 0
    %667 = vmatpush.bf16.msra.mxu0 0
    %668 = vmatpush.bf16.msra.mxu0 0
    %669 = vmatpush.bf16.msra.mxu0 0
    %670 = vmatpush.bf16.msra.mxu0 %v272
    %671 = vmatpush.bf16.msra.mxu0 %v270
    %672 = vmatpush.bf16.msra.mxu0 %v268
    %673 = vmatpush.bf16.msra.mxu0 %v266
    %674 = vmatmul.bf16.gmra.mxu0 %v664
    %v675 = vpop.f32.mrf.mxu0
    %v676 = vadd.f32 %v99, %v675
    %v677 = vpop.f32.mrf.mxu0
    %678 = vdwg.mxu0
    %679 = vmatpush.bf16.msra.mxu0 0
    %680 = vmatpush.bf16.msra.mxu0 0
    %681 = vmatpush.bf16.msra.mxu0 0
    %682 = vmatpush.bf16.msra.mxu0 0
    %683 = vmatpush.bf16.msra.mxu0 %v273
    %684 = vmatpush.bf16.msra.mxu0 %v271
    %685 = vmatpush.bf16.msra.mxu0 %v269
    %686 = vmatpush.bf16.msra.mxu0 %v267
    %687 = vmatmul.bf16.gmra.mxu0 %v664
    %v688 = vpop.f32.mrf.mxu0
    %v689 = vadd.f32 %v100, %v688
    %v690 = vpop.f32.mrf.mxu0
    %691 = vdwg.mxu0
    %v694 = vrot.slane %v689, 6
    %v695 = vsel %vm314, %v676, %v694
    %s697 = scalar_lea.vmem [#allocation2], 12
    %698 = vst [vmem:[%s697] sm:$0xf] %v695
    %s699 = scalar_lea.vmem %s0, 8
    %v700 = vld [vmem:[%s699] sm:$0x3]
    %702 = vset.pattern.permute.xlu0 0
    %703 = vperm.xlu0 %702, %v700
    %v704 = vpop.permute.xlu0 %703
    %v706 = vmul.f32 %v704, %v110
    %v707 = vmul.f32 %v704, %v111
    %v708 = vadd.f32 %v706, %v93
    %v709 = vadd.f32 %v707, %v94
    %710 = vmatpush.bf16.msra.mxu0 0
    %711 = vmatpush.bf16.msra.mxu0 0
    %712 = vmatpush.bf16.msra.mxu0 0
    %713 = vmatpush.bf16.msra.mxu0 0
    %714 = vmatpush.bf16.msra.mxu0 %v148
    %715 = vmatpush.bf16.msra.mxu0 %v146
    %716 = vmatpush.bf16.msra.mxu0 %v144
    %717 = vmatpush.bf16.msra.mxu0 %v142
    %718 = vmatmul.bf16.gmra.mxu0 %v664
    %v719 = vpop.f32.mrf.mxu0
    %v720 = vadd.f32 0.0, %v719
    %v721 = vpop.f32.mrf.mxu0
    %722 = vdwg.mxu0
    %723 = vmatpush.bf16.msra.mxu0 0
    %724 = vmatpush.bf16.msra.mxu0 0
    %725 = vmatpush.bf16.msra.mxu0 0
    %726 = vmatpush.bf16.msra.mxu0 0
    %727 = vmatpush.bf16.msra.mxu0 %v149
    %728 = vmatpush.bf16.msra.mxu0 %v147
    %729 = vmatpush.bf16.msra.mxu0 %v145
    %730 = vmatpush.bf16.msra.mxu0 %v143
    %731 = vmatmul.bf16.gmra.mxu0 %v664
    %v732 = vpop.f32.mrf.mxu0
    %v733 = vadd.f32 0.0, %v732
    %v734 = vpop.f32.mrf.mxu0
    %735 = vdwg.mxu0
    %v736 = vadd.f32 %v708, %v720
    %v737 = vadd.f32 %v709, %v733
    %v738 = vxor.u32 %v736, 2147483648
    %v739 = vmul.f32 %v738, 1.442695
    %v740 = vpow.pop %v739
    %v741 = vadd.f32 %v740, 1.0
    %v742 = vrcp.pop %v741
    %v743 = vmul.f32 %v741, %v742
    %v744 = vsub.f32 1.0, %v743
    %v745 = vmul.f32 %v742, %v744
    %v746 = vadd.f32 %v742, %v745
    %vm747 = vweird.f32 %v741
    %vm748 = vweird.f32 %v742
    %vm749 = vmor %vm747, %vm748
    %v750 = vsel %vm749, %v742, %v746
    %v751 = vand.u32 2147483647, %v741
    %vm752 = vcmp.eq.f32.partialorder %v751, 8.507059e+37
    %v753 = vand.u32 %v741, 2147483648
    %v754 = vor.u32 1.1754944e-38, %v753
    %v755 = vsel %vm752, %v754, %v750
    %v756 = vmul.f32 1.0, %v755
    %v757 = vtanh.pop %v737
    %v758 = vxor.u32 %v737, 2147483648
    %v759 = vmul.f32 %v758, 1.442695
    %v760 = vpow.pop %v759
    %v761 = vadd.f32 %v760, 1.0
    %v762 = vrcp.pop %v761
    %v763 = vmul.f32 %v761, %v762
    %v764 = vsub.f32 1.0, %v763
    %v765 = vmul.f32 %v762, %v764
    %v766 = vadd.f32 %v762, %v765
    %vm767 = vweird.f32 %v761
    %vm768 = vweird.f32 %v762
    %vm769 = vmor %vm767, %vm768
    %v770 = vsel %vm769, %v762, %v766
    %v771 = vand.u32 2147483647, %v761
    %vm772 = vcmp.eq.f32.partialorder %v771, 8.507059e+37
    %v773 = vand.u32 %v761, 2147483648
    %v774 = vor.u32 1.1754944e-38, %v773
    %v775 = vsel %vm772, %v774, %v770
    %v776 = vmul.f32 1.0, %v775
    %v777 = vmul.f32 %v756, %v656
    %v778 = vmul.f32 %v756, %v757
    %780 = vrot.lane.b32.xlu0 %v778, 64
    %v781 = vpop.permute.xlu0 %780
    %v783 = vadd.f32 %v777, %v781
    %v784 = vtanh.pop %v783
    %v785 = vmul.f32 %v776, %v784
    %v786 = vpack.c.bf16 %v785, %v785
    %788 = vrot.lane.b32.xlu0 %v786, 64
    %v789 = vpop.permute.xlu0 %788
    %v791 = vsel %vm158, %v789, 0
    %793 = vmatpush.bf16.msra.mxu0 0
    %794 = vmatpush.bf16.msra.mxu0 0
    %795 = vmatpush.bf16.msra.mxu0 0
    %796 = vmatpush.bf16.msra.mxu0 0
    %797 = vmatpush.bf16.msra.mxu0 %v272
    %798 = vmatpush.bf16.msra.mxu0 %v270
    %799 = vmatpush.bf16.msra.mxu0 %v268
    %800 = vmatpush.bf16.msra.mxu0 %v266
    %801 = vmatmul.bf16.gmra.mxu0 %v791
    %v802 = vpop.f32.mrf.mxu0
    %v803 = vadd.f32 %v99, %v802
    %v804 = vpop.f32.mrf.mxu0
    %805 = vdwg.mxu0
    %806 = vmatpush.bf16.msra.mxu0 0
    %807 = vmatpush.bf16.msra.mxu0 0
    %808 = vmatpush.bf16.msra.mxu0 0
    %809 = vmatpush.bf16.msra.mxu0 0
    %810 = vmatpush.bf16.msra.mxu0 %v273
    %811 = vmatpush.bf16.msra.mxu0 %v271
    %812 = vmatpush.bf16.msra.mxu0 %v269
    %813 = vmatpush.bf16.msra.mxu0 %v267
    %814 = vmatmul.bf16.gmra.mxu0 %v791
    %v815 = vpop.f32.mrf.mxu0
    %v816 = vadd.f32 %v100, %v815
    %v817 = vpop.f32.mrf.mxu0
    %818 = vdwg.mxu0
    %v821 = vrot.slane %v816, 6
    %v822 = vsel %vm314, %v803, %v821
    %s824 = scalar_lea.vmem [#allocation2], 16
    %825 = vst [vmem:[%s824] sm:$0xf] %v822
    %s826 = scalar_lea.vmem %s0, 10
    %v827 = vld [vmem:[%s826] sm:$0x3]
    %829 = vset.pattern.permute.xlu0 0
    %830 = vperm.xlu0 %829, %v827
    %v831 = vpop.permute.xlu0 %830
    %v833 = vmul.f32 %v831, %v110
    %v834 = vmul.f32 %v831, %v111
    %v835 = vadd.f32 %v833, %v93
    %v836 = vadd.f32 %v834, %v94
    %837 = vmatpush.bf16.msra.mxu0 0
    %838 = vmatpush.bf16.msra.mxu0 0
    %839 = vmatpush.bf16.msra.mxu0 0
    %840 = vmatpush.bf16.msra.mxu0 0
    %841 = vmatpush.bf16.msra.mxu0 %v148
    %842 = vmatpush.bf16.msra.mxu0 %v146
    %843 = vmatpush.bf16.msra.mxu0 %v144
    %844 = vmatpush.bf16.msra.mxu0 %v142
    %845 = vmatmul.bf16.gmra.mxu0 %v791
    %v846 = vpop.f32.mrf.mxu0
    %v847 = vadd.f32 0.0, %v846
    %v848 = vpop.f32.mrf.mxu0
    %849 = vdwg.mxu0
    %850 = vmatpush.bf16.msra.mxu0 0
    %851 = vmatpush.bf16.msra.mxu0 0
    %852 = vmatpush.bf16.msra.mxu0 0
    %853 = vmatpush.bf16.msra.mxu0 0
    %854 = vmatpush.bf16.msra.mxu0 %v149
    %855 = vmatpush.bf16.msra.mxu0 %v147
    %856 = vmatpush.bf16.msra.mxu0 %v145
    %857 = vmatpush.bf16.msra.mxu0 %v143
    %858 = vmatmul.bf16.gmra.mxu0 %v791
    %v859 = vpop.f32.mrf.mxu0
    %v860 = vadd.f32 0.0, %v859
    %v861 = vpop.f32.mrf.mxu0
    %862 = vdwg.mxu0
    %v863 = vadd.f32 %v835, %v847
    %v864 = vadd.f32 %v836, %v860
    %v865 = vxor.u32 %v863, 2147483648
    %v866 = vmul.f32 %v865, 1.442695
    %v867 = vpow.pop %v866
    %v868 = vadd.f32 %v867, 1.0
    %v869 = vrcp.pop %v868
    %v870 = vmul.f32 %v868, %v869
    %v871 = vsub.f32 1.0, %v870
    %v872 = vmul.f32 %v869, %v871
    %v873 = vadd.f32 %v869, %v872
    %vm874 = vweird.f32 %v868
    %vm875 = vweird.f32 %v869
    %vm876 = vmor %vm874, %vm875
    %v877 = vsel %vm876, %v869, %v873
    %v878 = vand.u32 2147483647, %v868
    %vm879 = vcmp.eq.f32.partialorder %v878, 8.507059e+37
    %v880 = vand.u32 %v868, 2147483648
    %v881 = vor.u32 1.1754944e-38, %v880
    %v882 = vsel %vm879, %v881, %v877
    %v883 = vmul.f32 1.0, %v882
    %v884 = vtanh.pop %v864
    %v885 = vxor.u32 %v864, 2147483648
    %v886 = vmul.f32 %v885, 1.442695
    %v887 = vpow.pop %v886
    %v888 = vadd.f32 %v887, 1.0
    %v889 = vrcp.pop %v888
    %v890 = vmul.f32 %v888, %v889
    %v891 = vsub.f32 1.0, %v890
    %v892 = vmul.f32 %v889, %v891
    %v893 = vadd.f32 %v889, %v892
    %vm894 = vweird.f32 %v888
    %vm895 = vweird.f32 %v889
    %vm896 = vmor %vm894, %vm895
    %v897 = vsel %vm896, %v889, %v893
    %v898 = vand.u32 2147483647, %v888
    %vm899 = vcmp.eq.f32.partialorder %v898, 8.507059e+37
    %v900 = vand.u32 %v888, 2147483648
    %v901 = vor.u32 1.1754944e-38, %v900
    %v902 = vsel %vm899, %v901, %v897
    %v903 = vmul.f32 1.0, %v902
    %v904 = vmul.f32 %v883, %v783
    %v905 = vmul.f32 %v883, %v884
    %907 = vrot.lane.b32.xlu0 %v905, 64
    %v908 = vpop.permute.xlu0 %907
    %v910 = vadd.f32 %v904, %v908
    %v911 = vtanh.pop %v910
    %v912 = vmul.f32 %v903, %v911
    %v913 = vpack.c.bf16 %v912, %v912
    %915 = vrot.lane.b32.xlu0 %v913, 64
    %v916 = vpop.permute.xlu0 %915
    %v918 = vsel %vm158, %v916, 0
    %920 = vmatpush.bf16.msra.mxu0 0
    %921 = vmatpush.bf16.msra.mxu0 0
    %922 = vmatpush.bf16.msra.mxu0 0
    %923 = vmatpush.bf16.msra.mxu0 0
    %924 = vmatpush.bf16.msra.mxu0 %v272
    %925 = vmatpush.bf16.msra.mxu0 %v270
    %926 = vmatpush.bf16.msra.mxu0 %v268
    %927 = vmatpush.bf16.msra.mxu0 %v266
    %928 = vmatmul.bf16.gmra.mxu0 %v918
    %v929 = vpop.f32.mrf.mxu0
    %v930 = vadd.f32 %v99, %v929
    %v931 = vpop.f32.mrf.mxu0
    %932 = vdwg.mxu0
    %933 = vmatpush.bf16.msra.mxu0 0
    %934 = vmatpush.bf16.msra.mxu0 0
    %935 = vmatpush.bf16.msra.mxu0 0
    %936 = vmatpush.bf16.msra.mxu0 0
    %937 = vmatpush.bf16.msra.mxu0 %v273
    %938 = vmatpush.bf16.msra.mxu0 %v271
    %939 = vmatpush.bf16.msra.mxu0 %v269
    %940 = vmatpush.bf16.msra.mxu0 %v267
    %941 = vmatmul.bf16.gmra.mxu0 %v918
    %v942 = vpop.f32.mrf.mxu0
    %v943 = vadd.f32 %v100, %v942
    %v944 = vpop.f32.mrf.mxu0
    %945 = vdwg.mxu0
    %v948 = vrot.slane %v943, 6
    %v949 = vsel %vm314, %v930, %v948
    %s951 = scalar_lea.vmem [#allocation2], 20
    %952 = vst [vmem:[%s951] sm:$0xf] %v949
    %s953 = scalar_lea.vmem %s0, 12
    %v954 = vld [vmem:[%s953] sm:$0x3]
    %956 = vset.pattern.permute.xlu0 0
    %957 = vperm.xlu0 %956, %v954
    %v958 = vpop.permute.xlu0 %957
    %v960 = vmul.f32 %v958, %v110
    %v961 = vmul.f32 %v958, %v111
    %v962 = vadd.f32 %v960, %v93
    %v963 = vadd.f32 %v961, %v94
    %964 = vmatpush.bf16.msra.mxu0 0
    %965 = vmatpush.bf16.msra.mxu0 0
    %966 = vmatpush.bf16.msra.mxu0 0
    %967 = vmatpush.bf16.msra.mxu0 0
    %968 = vmatpush.bf16.msra.mxu0 %v148
    %969 = vmatpush.bf16.msra.mxu0 %v146
    %970 = vmatpush.bf16.msra.mxu0 %v144
    %971 = vmatpush.bf16.msra.mxu0 %v142
    %972 = vmatmul.bf16.gmra.mxu0 %v918
    %v973 = vpop.f32.mrf.mxu0
    %v974 = vadd.f32 0.0, %v973
    %v975 = vpop.f32.mrf.mxu0
    %976 = vdwg.mxu0
    %977 = vmatpush.bf16.msra.mxu0 0
    %978 = vmatpush.bf16.msra.mxu0 0
    %979 = vmatpush.bf16.msra.mxu0 0
    %980 = vmatpush.bf16.msra.mxu0 0
    %981 = vmatpush.bf16.msra.mxu0 %v149
    %982 = vmatpush.bf16.msra.mxu0 %v147
    %983 = vmatpush.bf16.msra.mxu0 %v145
    %984 = vmatpush.bf16.msra.mxu0 %v143
    %985 = vmatmul.bf16.gmra.mxu0 %v918
    %v986 = vpop.f32.mrf.mxu0
    %v987 = vadd.f32 0.0, %v986
    %v988 = vpop.f32.mrf.mxu0
    %989 = vdwg.mxu0
    %v990 = vadd.f32 %v962, %v974
    %v991 = vadd.f32 %v963, %v987
    %v992 = vxor.u32 %v990, 2147483648
    %v993 = vmul.f32 %v992, 1.442695
    %v994 = vpow.pop %v993
    %v995 = vadd.f32 %v994, 1.0
    %v996 = vrcp.pop %v995
    %v997 = vmul.f32 %v995, %v996
    %v998 = vsub.f32 1.0, %v997
    %v999 = vmul.f32 %v996, %v998
    %v1000 = vadd.f32 %v996, %v999
    %vm1001 = vweird.f32 %v995
    %vm1002 = vweird.f32 %v996
    %vm1003 = vmor %vm1001, %vm1002
    %v1004 = vsel %vm1003, %v996, %v1000
    %v1005 = vand.u32 2147483647, %v995
    %vm1006 = vcmp.eq.f32.partialorder %v1005, 8.507059e+37
    %v1007 = vand.u32 %v995, 2147483648
    %v1008 = vor.u32 1.1754944e-38, %v1007
    %v1009 = vsel %vm1006, %v1008, %v1004
    %v1010 = vmul.f32 1.0, %v1009
    %v1011 = vtanh.pop %v991
    %v1012 = vxor.u32 %v991, 2147483648
    %v1013 = vmul.f32 %v1012, 1.442695
    %v1014 = vpow.pop %v1013
    %v1015 = vadd.f32 %v1014, 1.0
    %v1016 = vrcp.pop %v1015
    %v1017 = vmul.f32 %v1015, %v1016
    %v1018 = vsub.f32 1.0, %v1017
    %v1019 = vmul.f32 %v1016, %v1018
    %v1020 = vadd.f32 %v1016, %v1019
    %vm1021 = vweird.f32 %v1015
    %vm1022 = vweird.f32 %v1016
    %vm1023 = vmor %vm1021, %vm1022
    %v1024 = vsel %vm1023, %v1016, %v1020
    %v1025 = vand.u32 2147483647, %v1015
    %vm1026 = vcmp.eq.f32.partialorder %v1025, 8.507059e+37
    %v1027 = vand.u32 %v1015, 2147483648
    %v1028 = vor.u32 1.1754944e-38, %v1027
    %v1029 = vsel %vm1026, %v1028, %v1024
    %v1030 = vmul.f32 1.0, %v1029
    %v1031 = vmul.f32 %v1010, %v910
    %v1032 = vmul.f32 %v1010, %v1011
    %1034 = vrot.lane.b32.xlu0 %v1032, 64
    %v1035 = vpop.permute.xlu0 %1034
    %v1037 = vadd.f32 %v1031, %v1035
    %v1038 = vtanh.pop %v1037
    %v1039 = vmul.f32 %v1030, %v1038
    %v1040 = vpack.c.bf16 %v1039, %v1039
    %1042 = vrot.lane.b32.xlu0 %v1040, 64
    %v1043 = vpop.permute.xlu0 %1042
    %v1045 = vsel %vm158, %v1043, 0
    %1047 = vmatpush.bf16.msra.mxu0 0
    %1048 = vmatpush.bf16.msra.mxu0 0
    %1049 = vmatpush.bf16.msra.mxu0 0
    %1050 = vmatpush.bf16.msra.mxu0 0
    %1051 = vmatpush.bf16.msra.mxu0 %v272
    %1052 = vmatpush.bf16.msra.mxu0 %v270
    %1053 = vmatpush.bf16.msra.mxu0 %v268
    %1054 = vmatpush.bf16.msra.mxu0 %v266
    %1055 = vmatmul.bf16.gmra.mxu0 %v1045
    %v1056 = vpop.f32.mrf.mxu0
    %v1057 = vadd.f32 %v99, %v1056
    %v1058 = vpop.f32.mrf.mxu0
    %1059 = vdwg.mxu0
    %1060 = vmatpush.bf16.msra.mxu0 0
    %1061 = vmatpush.bf16.msra.mxu0 0
    %1062 = vmatpush.bf16.msra.mxu0 0
    %1063 = vmatpush.bf16.msra.mxu0 0
    %1064 = vmatpush.bf16.msra.mxu0 %v273
    %1065 = vmatpush.bf16.msra.mxu0 %v271
    %1066 = vmatpush.bf16.msra.mxu0 %v269
    %1067 = vmatpush.bf16.msra.mxu0 %v267
    %1068 = vmatmul.bf16.gmra.mxu0 %v1045
    %v1069 = vpop.f32.mrf.mxu0
    %v1070 = vadd.f32 %v100, %v1069
    %v1071 = vpop.f32.mrf.mxu0
    %1072 = vdwg.mxu0
    %v1075 = vrot.slane %v1070, 6
    %v1076 = vsel %vm314, %v1057, %v1075
    %s1078 = scalar_lea.vmem [#allocation2], 24
    %1079 = vst [vmem:[%s1078] sm:$0xf] %v1076
    %s1080 = scalar_lea.vmem %s0, 14
    %v1081 = vld [vmem:[%s1080] sm:$0x3]
    %1083 = vset.pattern.permute.xlu0 0
    %1084 = vperm.xlu0 %1083, %v1081
    %v1085 = vpop.permute.xlu0 %1084
    %v1087 = vmul.f32 %v1085, %v110
    %v1088 = vmul.f32 %v1085, %v111
    %v1089 = vadd.f32 %v1087, %v93
    %v1090 = vadd.f32 %v1088, %v94
    %1091 = vmatpush.bf16.msra.mxu0 0
    %1092 = vmatpush.bf16.msra.mxu0 0
    %1093 = vmatpush.bf16.msra.mxu0 0
    %1094 = vmatpush.bf16.msra.mxu0 0
    %1095 = vmatpush.bf16.msra.mxu0 %v148
    %1096 = vmatpush.bf16.msra.mxu0 %v146
    %1097 = vmatpush.bf16.msra.mxu0 %v144
    %1098 = vmatpush.bf16.msra.mxu0 %v142
    %1099 = vmatmul.bf16.gmra.mxu0 %v1045
    %v1100 = vpop.f32.mrf.mxu0
    %v1101 = vadd.f32 0.0, %v1100
    %v1102 = vpop.f32.mrf.mxu0
    %1103 = vdwg.mxu0
    %1104 = vmatpush.bf16.msra.mxu0 0
    %1105 = vmatpush.bf16.msra.mxu0 0
    %1106 = vmatpush.bf16.msra.mxu0 0
    %1107 = vmatpush.bf16.msra.mxu0 0
    %1108 = vmatpush.bf16.msra.mxu0 %v149
    %1109 = vmatpush.bf16.msra.mxu0 %v147
    %1110 = vmatpush.bf16.msra.mxu0 %v145
    %1111 = vmatpush.bf16.msra.mxu0 %v143
    %1112 = vmatmul.bf16.gmra.mxu0 %v1045
    %v1113 = vpop.f32.mrf.mxu0
    %v1114 = vadd.f32 0.0, %v1113
    %v1115 = vpop.f32.mrf.mxu0
    %1116 = vdwg.mxu0
    %v1117 = vadd.f32 %v1089, %v1101
    %v1118 = vadd.f32 %v1090, %v1114
    %v1119 = vxor.u32 %v1117, 2147483648
    %v1120 = vmul.f32 %v1119, 1.442695
    %v1121 = vpow.pop %v1120
    %v1122 = vadd.f32 %v1121, 1.0
    %v1123 = vrcp.pop %v1122
    %v1124 = vmul.f32 %v1122, %v1123
    %v1125 = vsub.f32 1.0, %v1124
    %v1126 = vmul.f32 %v1123, %v1125
    %v1127 = vadd.f32 %v1123, %v1126
    %vm1128 = vweird.f32 %v1122
    %vm1129 = vweird.f32 %v1123
    %vm1130 = vmor %vm1128, %vm1129
    %v1131 = vsel %vm1130, %v1123, %v1127
    %v1132 = vand.u32 2147483647, %v1122
    %vm1133 = vcmp.eq.f32.partialorder %v1132, 8.507059e+37
    %v1134 = vand.u32 %v1122, 2147483648
    %v1135 = vor.u32 1.1754944e-38, %v1134
    %v1136 = vsel %vm1133, %v1135, %v1131
    %v1137 = vmul.f32 1.0, %v1136
    %v1138 = vtanh.pop %v1118
    %v1139 = vxor.u32 %v1118, 2147483648
    %v1140 = vmul.f32 %v1139, 1.442695
    %v1141 = vpow.pop %v1140
    %v1142 = vadd.f32 %v1141, 1.0
    %v1143 = vrcp.pop %v1142
    %v1144 = vmul.f32 %v1142, %v1143
    %v1145 = vsub.f32 1.0, %v1144
    %v1146 = vmul.f32 %v1143, %v1145
    %v1147 = vadd.f32 %v1143, %v1146
    %vm1148 = vweird.f32 %v1142
    %vm1149 = vweird.f32 %v1143
    %vm1150 = vmor %vm1148, %vm1149
    %v1151 = vsel %vm1150, %v1143, %v1147
    %v1152 = vand.u32 2147483647, %v1142
    %vm1153 = vcmp.eq.f32.partialorder %v1152, 8.507059e+37
    %v1154 = vand.u32 %v1142, 2147483648
    %v1155 = vor.u32 1.1754944e-38, %v1154
    %v1156 = vsel %vm1153, %v1155, %v1151
    %v1157 = vmul.f32 1.0, %v1156
    %v1158 = vmul.f32 %v1137, %v1037
    %v1159 = vmul.f32 %v1137, %v1138
    %1161 = vrot.lane.b32.xlu0 %v1159, 64
    %v1162 = vpop.permute.xlu0 %1161
    %v1164 = vadd.f32 %v1158, %v1162
    %v1165 = vtanh.pop %v1164
    %v1166 = vmul.f32 %v1157, %v1165
    %v1167 = vpack.c.bf16 %v1166, %v1166
    %1169 = vrot.lane.b32.xlu0 %v1167, 64
    %v1170 = vpop.permute.xlu0 %1169
    %v1172 = vsel %vm158, %v1170, 0
    %1174 = vmatpush.bf16.msra.mxu0 0
    %1175 = vmatpush.bf16.msra.mxu0 0
    %1176 = vmatpush.bf16.msra.mxu0 0
    %1177 = vmatpush.bf16.msra.mxu0 0
    %1178 = vmatpush.bf16.msra.mxu0 %v272
    %1179 = vmatpush.bf16.msra.mxu0 %v270
    %1180 = vmatpush.bf16.msra.mxu0 %v268
    %1181 = vmatpush.bf16.msra.mxu0 %v266
    %1182 = vmatmul.bf16.gmra.mxu0 %v1172
    %v1183 = vpop.f32.mrf.mxu0
    %v1184 = vadd.f32 %v99, %v1183
    %v1185 = vpop.f32.mrf.mxu0
    %1186 = vdwg.mxu0
    %1187 = vmatpush.bf16.msra.mxu0 0
    %1188 = vmatpush.bf16.msra.mxu0 0
    %1189 = vmatpush.bf16.msra.mxu0 0
    %1190 = vmatpush.bf16.msra.mxu0 0
    %1191 = vmatpush.bf16.msra.mxu0 %v273
    %1192 = vmatpush.bf16.msra.mxu0 %v271
    %1193 = vmatpush.bf16.msra.mxu0 %v269
    %1194 = vmatpush.bf16.msra.mxu0 %v267
    %1195 = vmatmul.bf16.gmra.mxu0 %v1172
    %v1196 = vpop.f32.mrf.mxu0
    %v1197 = vadd.f32 %v100, %v1196
    %v1198 = vpop.f32.mrf.mxu0
    %1199 = vdwg.mxu0
    %v1202 = vrot.slane %v1197, 6
    %v1203 = vsel %vm314, %v1184, %v1202
    %s1205 = scalar_lea.vmem [#allocation2], 28
    %1206 = vst [vmem:[%s1205] sm:$0xf] %v1203
    %v1207 = vld [vmem:[#allocation2] sm:$0xf]
    %v1216 = vunpack.c.l.b16 %v83
    %v1217 = vunpack.c.h.b16 %v83
    %v1218 = vunpack.c.l.b16 %v84
    %v1219 = vunpack.c.h.b16 %v84
    %v1220 = vunpack.c.l.b16 %v85
    %v1221 = vunpack.c.h.b16 %v85
    %v1222 = vunpack.c.l.b16 %v86
    %v1223 = vunpack.c.h.b16 %v86
    %v1224 = vunpack.c.l.b16 %v87
    %v1225 = vunpack.c.h.b16 %v87
    %v1226 = vunpack.c.l.b16 %v88
    %v1227 = vunpack.c.h.b16 %v88
    %v1228 = vunpack.c.l.b16 %v89
    %v1229 = vunpack.c.h.b16 %v89
    %v1230 = vunpack.c.l.b16 %v90
    %v1231 = vunpack.c.h.b16 %v90
    %v1232 = vpack.c.b16 %v1218, %v1216
    %v1233 = vpack.c.b16 %v1219, %v1217
    %v1234 = vpack.c.b16 %v1222, %v1220
    %v1235 = vpack.c.b16 %v1223, %v1221
    %v1236 = vpack.c.b16 %v1226, %v1224
    %v1237 = vpack.c.b16 %v1227, %v1225
    %v1238 = vpack.c.b16 %v1230, %v1228
    %v1239 = vpack.c.b16 %v1231, %v1229
    %1248 = vmatpush.bf16.msra.mxu0 0
    %1249 = vmatpush.bf16.msra.mxu0 0
    %1250 = vmatpush.bf16.msra.mxu0 0
    %1251 = vmatpush.bf16.msra.mxu0 0
    %1252 = vmatpush.bf16.msra.mxu0 %v1238
    %1253 = vmatpush.bf16.msra.mxu0 %v1236
    %1254 = vmatpush.bf16.msra.mxu0 %v1234
    %1255 = vmatpush.bf16.msra.mxu0 %v1232
    %1256 = vmatmul.bf16.gmra.mxu0 %v160
    %v1257 = vpop.f32.mrf.mxu0
    %v1258 = vadd.f32 0.0, %v1257
    %v1259 = vpop.f32.mrf.mxu0
    %1260 = vdwg.mxu0
    %1261 = vmatpush.bf16.msra.mxu0 0
    %1262 = vmatpush.bf16.msra.mxu0 0
    %1263 = vmatpush.bf16.msra.mxu0 0
    %1264 = vmatpush.bf16.msra.mxu0 0
    %1265 = vmatpush.bf16.msra.mxu0 %v1239
    %1266 = vmatpush.bf16.msra.mxu0 %v1237
    %1267 = vmatpush.bf16.msra.mxu0 %v1235
    %1268 = vmatpush.bf16.msra.mxu0 %v1233
    %1269 = vmatmul.bf16.gmra.mxu0 %v160
    %v1270 = vpop.f32.mrf.mxu0
    %v1271 = vadd.f32 0.0, %v1270
    %v1272 = vpop.f32.mrf.mxu0
    %1273 = vdwg.mxu0
    %v1276 = vrot.slane %v1271, 6
    %v1277 = vsel %vm314, %v1258, %v1276
    %v1279 = vadd.f32 %v1207, %v1277
    %v1280 = vxor.u32 %v1279, 2147483648
    %v1281 = vmul.f32 %v1280, 1.442695
    %v1282 = vpow.pop %v1281
    %v1283 = vadd.f32 %v1282, 1.0
    %v1284 = vrcp.pop %v1283
    %v1285 = vmul.f32 %v1283, %v1284
    %v1286 = vsub.f32 1.0, %v1285
    %v1287 = vmul.f32 %v1284, %v1286
    %v1288 = vadd.f32 %v1284, %v1287
    %vm1289 = vweird.f32 %v1283
    %vm1290 = vweird.f32 %v1284
    %vm1291 = vmor %vm1289, %vm1290
    %v1292 = vsel %vm1291, %v1284, %v1288
    %v1293 = vand.u32 2147483647, %v1283
    %vm1294 = vcmp.eq.f32.partialorder %v1293, 8.507059e+37
    %v1295 = vand.u32 %v1283, 2147483648
    %v1296 = vor.u32 1.1754944e-38, %v1295
    %v1297 = vsel %vm1294, %v1296, %v1292
    %v1298 = vmul.f32 1.0, %v1297
    %v1300 = vrot.slane %v1279, 2
    %v1302 = vtanh.pop %v1300
    %1303 = vrot.lane.b32.xlu0 %v1279, 64
    %v1304 = vpop.permute.xlu0 %1303
    %v1305 = vrot.slane %v1304, 2
    %v1307 = vxor.u32 %v1305, 2147483648
    %v1308 = vmul.f32 %v1307, 1.442695
    %v1309 = vpow.pop %v1308
    %v1310 = vadd.f32 %v1309, 1.0
    %v1311 = vrcp.pop %v1310
    %v1312 = vmul.f32 %v1310, %v1311
    %v1313 = vsub.f32 1.0, %v1312
    %v1314 = vmul.f32 %v1311, %v1313
    %v1315 = vadd.f32 %v1311, %v1314
    %vm1316 = vweird.f32 %v1310
    %vm1317 = vweird.f32 %v1311
    %vm1318 = vmor %vm1316, %vm1317
    %v1319 = vsel %vm1318, %v1311, %v1315
    %v1320 = vand.u32 2147483647, %v1310
    %vm1321 = vcmp.eq.f32.partialorder %v1320, 8.507059e+37
    %v1322 = vand.u32 %v1310, 2147483648
    %v1323 = vor.u32 1.1754944e-38, %v1322
    %v1324 = vsel %vm1321, %v1323, %v1319
    %v1325 = vmul.f32 1.0, %v1324
    %v1326 = vmul.f32 %v1298, 0.0
    %v1327 = vmul.f32 %v1298, %v1302
    %1329 = vrot.lane.b32.xlu0 %v1327, 64
    %v1330 = vpop.permute.xlu0 %1329
    %v1332 = vadd.f32 %v1326, %v1330
    %v1333 = vtanh.pop %v1332
    %1335 = vrot.lane.b32.xlu0 %v1333, 64
    %v1336 = vpop.permute.xlu0 %1335
    %v1338 = vmul.f32 %v1325, %v1336
    %v1339 = vpack.c.bf16 %v1338, %v1338
    %v1340 = vld [vmem:[%s443] sm:$0xf]
    %v1342 = vsel %vm158, %v1339, 0
    %1344 = vmatpush.bf16.msra.mxu0 0
    %1345 = vmatpush.bf16.msra.mxu0 0
    %1346 = vmatpush.bf16.msra.mxu0 0
    %1347 = vmatpush.bf16.msra.mxu0 0
    %1348 = vmatpush.bf16.msra.mxu0 %v1238
    %1349 = vmatpush.bf16.msra.mxu0 %v1236
    %1350 = vmatpush.bf16.msra.mxu0 %v1234
    %1351 = vmatpush.bf16.msra.mxu0 %v1232
    %1352 = vmatmul.bf16.gmra.mxu0 %v1342
    %v1353 = vpop.f32.mrf.mxu0
    %v1354 = vadd.f32 0.0, %v1353
    %v1355 = vpop.f32.mrf.mxu0
    %1356 = vdwg.mxu0
    %1357 = vmatpush.bf16.msra.mxu0 0
    %1358 = vmatpush.bf16.msra.mxu0 0
    %1359 = vmatpush.bf16.msra.mxu0 0
    %1360 = vmatpush.bf16.msra.mxu0 0
    %1361 = vmatpush.bf16.msra.mxu0 %v1239
    %1362 = vmatpush.bf16.msra.mxu0 %v1237
    %1363 = vmatpush.bf16.msra.mxu0 %v1235
    %1364 = vmatpush.bf16.msra.mxu0 %v1233
    %1365 = vmatmul.bf16.gmra.mxu0 %v1342
    %v1366 = vpop.f32.mrf.mxu0
    %v1367 = vadd.f32 0.0, %v1366
    %v1368 = vpop.f32.mrf.mxu0
    %1369 = vdwg.mxu0
    %v1372 = vrot.slane %v1367, 6
    %v1373 = vsel %vm314, %v1354, %v1372
    %v1375 = vadd.f32 %v1340, %v1373
    %v1376 = vxor.u32 %v1375, 2147483648
    %v1377 = vmul.f32 %v1376, 1.442695
    %v1378 = vpow.pop %v1377
    %v1379 = vadd.f32 %v1378, 1.0
    %v1380 = vrcp.pop %v1379
    %v1381 = vmul.f32 %v1379, %v1380
    %v1382 = vsub.f32 1.0, %v1381
    %v1383 = vmul.f32 %v1380, %v1382
    %v1384 = vadd.f32 %v1380, %v1383
    %vm1385 = vweird.f32 %v1379
    %vm1386 = vweird.f32 %v1380
    %vm1387 = vmor %vm1385, %vm1386
    %v1388 = vsel %vm1387, %v1380, %v1384
    %v1389 = vand.u32 2147483647, %v1379
    %vm1390 = vcmp.eq.f32.partialorder %v1389, 8.507059e+37
    %v1391 = vand.u32 %v1379, 2147483648
    %v1392 = vor.u32 1.1754944e-38, %v1391
    %v1393 = vsel %vm1390, %v1392, %v1388
    %v1394 = vmul.f32 1.0, %v1393
    %v1396 = vrot.slane %v1375, 2
    %v1398 = vtanh.pop %v1396
    %1399 = vrot.lane.b32.xlu0 %v1375, 64
    %v1400 = vpop.permute.xlu0 %1399
    %v1401 = vrot.slane %v1400, 2
    %v1403 = vxor.u32 %v1401, 2147483648
    %v1404 = vmul.f32 %v1403, 1.442695
    %v1405 = vpow.pop %v1404
    %v1406 = vadd.f32 %v1405, 1.0
    %v1407 = vrcp.pop %v1406
    %v1408 = vmul.f32 %v1406, %v1407
    %v1409 = vsub.f32 1.0, %v1408
    %v1410 = vmul.f32 %v1407, %v1409
    %v1411 = vadd.f32 %v1407, %v1410
    %vm1412 = vweird.f32 %v1406
    %vm1413 = vweird.f32 %v1407
    %vm1414 = vmor %vm1412, %vm1413
    %v1415 = vsel %vm1414, %v1407, %v1411
    %v1416 = vand.u32 2147483647, %v1406
    %vm1417 = vcmp.eq.f32.partialorder %v1416, 8.507059e+37
    %v1418 = vand.u32 %v1406, 2147483648
    %v1419 = vor.u32 1.1754944e-38, %v1418
    %v1420 = vsel %vm1417, %v1419, %v1415
    %v1421 = vmul.f32 1.0, %v1420
    %v1422 = vmul.f32 %v1394, %v1332
    %v1423 = vmul.f32 %v1394, %v1398
    %1425 = vrot.lane.b32.xlu0 %v1423, 64
    %v1426 = vpop.permute.xlu0 %1425
    %v1428 = vadd.f32 %v1422, %v1426
    %v1429 = vtanh.pop %v1428
    %1431 = vrot.lane.b32.xlu0 %v1429, 64
    %v1432 = vpop.permute.xlu0 %1431
    %v1434 = vmul.f32 %v1421, %v1432
    %v1435 = vpack.c.bf16 %v1434, %v1434
    %v1436 = vld [vmem:[%s570] sm:$0xf]
    %v1438 = vsel %vm158, %v1435, 0
    %1440 = vmatpush.bf16.msra.mxu0 0
    %1441 = vmatpush.bf16.msra.mxu0 0
    %1442 = vmatpush.bf16.msra.mxu0 0
    %1443 = vmatpush.bf16.msra.mxu0 0
    %1444 = vmatpush.bf16.msra.mxu0 %v1238
    %1445 = vmatpush.bf16.msra.mxu0 %v1236
    %1446 = vmatpush.bf16.msra.mxu0 %v1234
    %1447 = vmatpush.bf16.msra.mxu0 %v1232
    %1448 = vmatmul.bf16.gmra.mxu0 %v1438
    %v1449 = vpop.f32.mrf.mxu0
    %v1450 = vadd.f32 0.0, %v1449
    %v1451 = vpop.f32.mrf.mxu0
    %1452 = vdwg.mxu0
    %1453 = vmatpush.bf16.msra.mxu0 0
    %1454 = vmatpush.bf16.msra.mxu0 0
    %1455 = vmatpush.bf16.msra.mxu0 0
    %1456 = vmatpush.bf16.msra.mxu0 0
    %1457 = vmatpush.bf16.msra.mxu0 %v1239
    %1458 = vmatpush.bf16.msra.mxu0 %v1237
    %1459 = vmatpush.bf16.msra.mxu0 %v1235
    %1460 = vmatpush.bf16.msra.mxu0 %v1233
    %1461 = vmatmul.bf16.gmra.mxu0 %v1438
    %v1462 = vpop.f32.mrf.mxu0
    %v1463 = vadd.f32 0.0, %v1462
    %v1464 = vpop.f32.mrf.mxu0
    %1465 = vdwg.mxu0
    %v1468 = vrot.slane %v1463, 6
    %v1469 = vsel %vm314, %v1450, %v1468
    %v1471 = vadd.f32 %v1436, %v1469
    %v1472 = vxor.u32 %v1471, 2147483648
    %v1473 = vmul.f32 %v1472, 1.442695
    %v1474 = vpow.pop %v1473
    %v1475 = vadd.f32 %v1474, 1.0
    %v1476 = vrcp.pop %v1475
    %v1477 = vmul.f32 %v1475, %v1476
    %v1478 = vsub.f32 1.0, %v1477
    %v1479 = vmul.f32 %v1476, %v1478
    %v1480 = vadd.f32 %v1476, %v1479
    %vm1481 = vweird.f32 %v1475
    %vm1482 = vweird.f32 %v1476
    %vm1483 = vmor %vm1481, %vm1482
    %v1484 = vsel %vm1483, %v1476, %v1480
    %v1485 = vand.u32 2147483647, %v1475
    %vm1486 = vcmp.eq.f32.partialorder %v1485, 8.507059e+37
    %v1487 = vand.u32 %v1475, 2147483648
    %v1488 = vor.u32 1.1754944e-38, %v1487
    %v1489 = vsel %vm1486, %v1488, %v1484
    %v1490 = vmul.f32 1.0, %v1489
    %v1492 = vrot.slane %v1471, 2
    %v1494 = vtanh.pop %v1492
    %1495 = vrot.lane.b32.xlu0 %v1471, 64
    %v1496 = vpop.permute.xlu0 %1495
    %v1497 = vrot.slane %v1496, 2
    %v1499 = vxor.u32 %v1497, 2147483648
    %v1500 = vmul.f32 %v1499, 1.442695
    %v1501 = vpow.pop %v1500
    %v1502 = vadd.f32 %v1501, 1.0
    %v1503 = vrcp.pop %v1502
    %v1504 = vmul.f32 %v1502, %v1503
    %v1505 = vsub.f32 1.0, %v1504
    %v1506 = vmul.f32 %v1503, %v1505
    %v1507 = vadd.f32 %v1503, %v1506
    %vm1508 = vweird.f32 %v1502
    %vm1509 = vweird.f32 %v1503
    %vm1510 = vmor %vm1508, %vm1509
    %v1511 = vsel %vm1510, %v1503, %v1507
    %v1512 = vand.u32 2147483647, %v1502
    %vm1513 = vcmp.eq.f32.partialorder %v1512, 8.507059e+37
    %v1514 = vand.u32 %v1502, 2147483648
    %v1515 = vor.u32 1.1754944e-38, %v1514
    %v1516 = vsel %vm1513, %v1515, %v1511
    %v1517 = vmul.f32 1.0, %v1516
    %v1518 = vmul.f32 %v1490, %v1428
    %v1519 = vmul.f32 %v1490, %v1494
    %1521 = vrot.lane.b32.xlu0 %v1519, 64
    %v1522 = vpop.permute.xlu0 %1521
    %v1524 = vadd.f32 %v1518, %v1522
    %v1525 = vtanh.pop %v1524
    %1527 = vrot.lane.b32.xlu0 %v1525, 64
    %v1528 = vpop.permute.xlu0 %1527
    %v1530 = vmul.f32 %v1517, %v1528
    %v1531 = vpack.c.bf16 %v1530, %v1530
    %v1532 = vld [vmem:[%s697] sm:$0xf]
    %v1534 = vsel %vm158, %v1531, 0
    %1536 = vmatpush.bf16.msra.mxu0 0
    %1537 = vmatpush.bf16.msra.mxu0 0
    %1538 = vmatpush.bf16.msra.mxu0 0
    %1539 = vmatpush.bf16.msra.mxu0 0
    %1540 = vmatpush.bf16.msra.mxu0 %v1238
    %1541 = vmatpush.bf16.msra.mxu0 %v1236
    %1542 = vmatpush.bf16.msra.mxu0 %v1234
    %1543 = vmatpush.bf16.msra.mxu0 %v1232
    %1544 = vmatmul.bf16.gmra.mxu0 %v1534
    %v1545 = vpop.f32.mrf.mxu0
    %v1546 = vadd.f32 0.0, %v1545
    %v1547 = vpop.f32.mrf.mxu0
    %1548 = vdwg.mxu0
    %1549 = vmatpush.bf16.msra.mxu0 0
    %1550 = vmatpush.bf16.msra.mxu0 0
    %1551 = vmatpush.bf16.msra.mxu0 0
    %1552 = vmatpush.bf16.msra.mxu0 0
    %1553 = vmatpush.bf16.msra.mxu0 %v1239
    %1554 = vmatpush.bf16.msra.mxu0 %v1237
    %1555 = vmatpush.bf16.msra.mxu0 %v1235
    %1556 = vmatpush.bf16.msra.mxu0 %v1233
    %1557 = vmatmul.bf16.gmra.mxu0 %v1534
    %v1558 = vpop.f32.mrf.mxu0
    %v1559 = vadd.f32 0.0, %v1558
    %v1560 = vpop.f32.mrf.mxu0
    %1561 = vdwg.mxu0
    %v1564 = vrot.slane %v1559, 6
    %v1565 = vsel %vm314, %v1546, %v1564
    %v1567 = vadd.f32 %v1532, %v1565
    %v1568 = vxor.u32 %v1567, 2147483648
    %v1569 = vmul.f32 %v1568, 1.442695
    %v1570 = vpow.pop %v1569
    %v1571 = vadd.f32 %v1570, 1.0
    %v1572 = vrcp.pop %v1571
    %v1573 = vmul.f32 %v1571, %v1572
    %v1574 = vsub.f32 1.0, %v1573
    %v1575 = vmul.f32 %v1572, %v1574
    %v1576 = vadd.f32 %v1572, %v1575
    %vm1577 = vweird.f32 %v1571
    %vm1578 = vweird.f32 %v1572
    %vm1579 = vmor %vm1577, %vm1578
    %v1580 = vsel %vm1579, %v1572, %v1576
    %v1581 = vand.u32 2147483647, %v1571
    %vm1582 = vcmp.eq.f32.partialorder %v1581, 8.507059e+37
    %v1583 = vand.u32 %v1571, 2147483648
    %v1584 = vor.u32 1.1754944e-38, %v1583
    %v1585 = vsel %vm1582, %v1584, %v1580
    %v1586 = vmul.f32 1.0, %v1585
    %v1588 = vrot.slane %v1567, 2
    %v1590 = vtanh.pop %v1588
    %1591 = vrot.lane.b32.xlu0 %v1567, 64
    %v1592 = vpop.permute.xlu0 %1591
    %v1593 = vrot.slane %v1592, 2
    %v1595 = vxor.u32 %v1593, 2147483648
    %v1596 = vmul.f32 %v1595, 1.442695
    %v1597 = vpow.pop %v1596
    %v1598 = vadd.f32 %v1597, 1.0
    %v1599 = vrcp.pop %v1598
    %v1600 = vmul.f32 %v1598, %v1599
    %v1601 = vsub.f32 1.0, %v1600
    %v1602 = vmul.f32 %v1599, %v1601
    %v1603 = vadd.f32 %v1599, %v1602
    %vm1604 = vweird.f32 %v1598
    %vm1605 = vweird.f32 %v1599
    %vm1606 = vmor %vm1604, %vm1605
    %v1607 = vsel %vm1606, %v1599, %v1603
    %v1608 = vand.u32 2147483647, %v1598
    %vm1609 = vcmp.eq.f32.partialorder %v1608, 8.507059e+37
    %v1610 = vand.u32 %v1598, 2147483648
    %v1611 = vor.u32 1.1754944e-38, %v1610
    %v1612 = vsel %vm1609, %v1611, %v1607
    %v1613 = vmul.f32 1.0, %v1612
    %v1614 = vmul.f32 %v1586, %v1524
    %v1615 = vmul.f32 %v1586, %v1590
    %1617 = vrot.lane.b32.xlu0 %v1615, 64
    %v1618 = vpop.permute.xlu0 %1617
    %v1620 = vadd.f32 %v1614, %v1618
    %v1621 = vtanh.pop %v1620
    %1623 = vrot.lane.b32.xlu0 %v1621, 64
    %v1624 = vpop.permute.xlu0 %1623
    %v1626 = vmul.f32 %v1613, %v1624
    %v1627 = vpack.c.bf16 %v1626, %v1626
    %v1628 = vld [vmem:[%s824] sm:$0xf]
    %v1630 = vsel %vm158, %v1627, 0
    %1632 = vmatpush.bf16.msra.mxu0 0
    %1633 = vmatpush.bf16.msra.mxu0 0
    %1634 = vmatpush.bf16.msra.mxu0 0
    %1635 = vmatpush.bf16.msra.mxu0 0
    %1636 = vmatpush.bf16.msra.mxu0 %v1238
    %1637 = vmatpush.bf16.msra.mxu0 %v1236
    %1638 = vmatpush.bf16.msra.mxu0 %v1234
    %1639 = vmatpush.bf16.msra.mxu0 %v1232
    %1640 = vmatmul.bf16.gmra.mxu0 %v1630
    %v1641 = vpop.f32.mrf.mxu0
    %v1642 = vadd.f32 0.0, %v1641
    %v1643 = vpop.f32.mrf.mxu0
    %1644 = vdwg.mxu0
    %1645 = vmatpush.bf16.msra.mxu0 0
    %1646 = vmatpush.bf16.msra.mxu0 0
    %1647 = vmatpush.bf16.msra.mxu0 0
    %1648 = vmatpush.bf16.msra.mxu0 0
    %1649 = vmatpush.bf16.msra.mxu0 %v1239
    %1650 = vmatpush.bf16.msra.mxu0 %v1237
    %1651 = vmatpush.bf16.msra.mxu0 %v1235
    %1652 = vmatpush.bf16.msra.mxu0 %v1233
    %1653 = vmatmul.bf16.gmra.mxu0 %v1630
    %v1654 = vpop.f32.mrf.mxu0
    %v1655 = vadd.f32 0.0, %v1654
    %v1656 = vpop.f32.mrf.mxu0
    %1657 = vdwg.mxu0
    %v1660 = vrot.slane %v1655, 6
    %v1661 = vsel %vm314, %v1642, %v1660
    %v1663 = vadd.f32 %v1628, %v1661
    %v1664 = vxor.u32 %v1663, 2147483648
    %v1665 = vmul.f32 %v1664, 1.442695
    %v1666 = vpow.pop %v1665
    %v1667 = vadd.f32 %v1666, 1.0
    %v1668 = vrcp.pop %v1667
    %v1669 = vmul.f32 %v1667, %v1668
    %v1670 = vsub.f32 1.0, %v1669
    %v1671 = vmul.f32 %v1668, %v1670
    %v1672 = vadd.f32 %v1668, %v1671
    %vm1673 = vweird.f32 %v1667
    %vm1674 = vweird.f32 %v1668
    %vm1675 = vmor %vm1673, %vm1674
    %v1676 = vsel %vm1675, %v1668, %v1672
    %v1677 = vand.u32 2147483647, %v1667
    %vm1678 = vcmp.eq.f32.partialorder %v1677, 8.507059e+37
    %v1679 = vand.u32 %v1667, 2147483648
    %v1680 = vor.u32 1.1754944e-38, %v1679
    %v1681 = vsel %vm1678, %v1680, %v1676
    %v1682 = vmul.f32 1.0, %v1681
    %v1684 = vrot.slane %v1663, 2
    %v1686 = vtanh.pop %v1684
    %1687 = vrot.lane.b32.xlu0 %v1663, 64
    %v1688 = vpop.permute.xlu0 %1687
    %v1689 = vrot.slane %v1688, 2
    %v1691 = vxor.u32 %v1689, 2147483648
    %v1692 = vmul.f32 %v1691, 1.442695
    %v1693 = vpow.pop %v1692
    %v1694 = vadd.f32 %v1693, 1.0
    %v1695 = vrcp.pop %v1694
    %v1696 = vmul.f32 %v1694, %v1695
    %v1697 = vsub.f32 1.0, %v1696
    %v1698 = vmul.f32 %v1695, %v1697
    %v1699 = vadd.f32 %v1695, %v1698
    %vm1700 = vweird.f32 %v1694
    %vm1701 = vweird.f32 %v1695
    %vm1702 = vmor %vm1700, %vm1701
    %v1703 = vsel %vm1702, %v1695, %v1699
    %v1704 = vand.u32 2147483647, %v1694
    %vm1705 = vcmp.eq.f32.partialorder %v1704, 8.507059e+37
    %v1706 = vand.u32 %v1694, 2147483648
    %v1707 = vor.u32 1.1754944e-38, %v1706
    %v1708 = vsel %vm1705, %v1707, %v1703
    %v1709 = vmul.f32 1.0, %v1708
    %v1710 = vmul.f32 %v1682, %v1620
    %v1711 = vmul.f32 %v1682, %v1686
    %1713 = vrot.lane.b32.xlu0 %v1711, 64
    %v1714 = vpop.permute.xlu0 %1713
    %v1716 = vadd.f32 %v1710, %v1714
    %v1717 = vtanh.pop %v1716
    %1719 = vrot.lane.b32.xlu0 %v1717, 64
    %v1720 = vpop.permute.xlu0 %1719
    %v1722 = vmul.f32 %v1709, %v1720
    %v1723 = vpack.c.bf16 %v1722, %v1722
    %v1724 = vld [vmem:[%s951] sm:$0xf]
    %v1726 = vsel %vm158, %v1723, 0
    %1728 = vmatpush.bf16.msra.mxu0 0
    %1729 = vmatpush.bf16.msra.mxu0 0
    %1730 = vmatpush.bf16.msra.mxu0 0
    %1731 = vmatpush.bf16.msra.mxu0 0
    %1732 = vmatpush.bf16.msra.mxu0 %v1238
    %1733 = vmatpush.bf16.msra.mxu0 %v1236
    %1734 = vmatpush.bf16.msra.mxu0 %v1234
    %1735 = vmatpush.bf16.msra.mxu0 %v1232
    %1736 = vmatmul.bf16.gmra.mxu0 %v1726
    %v1737 = vpop.f32.mrf.mxu0
    %v1738 = vadd.f32 0.0, %v1737
    %v1739 = vpop.f32.mrf.mxu0
    %1740 = vdwg.mxu0
    %1741 = vmatpush.bf16.msra.mxu0 0
    %1742 = vmatpush.bf16.msra.mxu0 0
    %1743 = vmatpush.bf16.msra.mxu0 0
    %1744 = vmatpush.bf16.msra.mxu0 0
    %1745 = vmatpush.bf16.msra.mxu0 %v1239
    %1746 = vmatpush.bf16.msra.mxu0 %v1237
    %1747 = vmatpush.bf16.msra.mxu0 %v1235
    %1748 = vmatpush.bf16.msra.mxu0 %v1233
    %1749 = vmatmul.bf16.gmra.mxu0 %v1726
    %v1750 = vpop.f32.mrf.mxu0
    %v1751 = vadd.f32 0.0, %v1750
    %v1752 = vpop.f32.mrf.mxu0
    %1753 = vdwg.mxu0
    %v1756 = vrot.slane %v1751, 6
    %v1757 = vsel %vm314, %v1738, %v1756
    %v1759 = vadd.f32 %v1724, %v1757
    %v1760 = vxor.u32 %v1759, 2147483648
    %v1761 = vmul.f32 %v1760, 1.442695
    %v1762 = vpow.pop %v1761
    %v1763 = vadd.f32 %v1762, 1.0
    %v1764 = vrcp.pop %v1763
    %v1765 = vmul.f32 %v1763, %v1764
    %v1766 = vsub.f32 1.0, %v1765
    %v1767 = vmul.f32 %v1764, %v1766
    %v1768 = vadd.f32 %v1764, %v1767
    %vm1769 = vweird.f32 %v1763
    %vm1770 = vweird.f32 %v1764
    %vm1771 = vmor %vm1769, %vm1770
    %v1772 = vsel %vm1771, %v1764, %v1768
    %v1773 = vand.u32 2147483647, %v1763
    %vm1774 = vcmp.eq.f32.partialorder %v1773, 8.507059e+37
    %v1775 = vand.u32 %v1763, 2147483648
    %v1776 = vor.u32 1.1754944e-38, %v1775
    %v1777 = vsel %vm1774, %v1776, %v1772
    %v1778 = vmul.f32 1.0, %v1777
    %v1780 = vrot.slane %v1759, 2
    %v1782 = vtanh.pop %v1780
    %1783 = vrot.lane.b32.xlu0 %v1759, 64
    %v1784 = vpop.permute.xlu0 %1783
    %v1785 = vrot.slane %v1784, 2
    %v1787 = vxor.u32 %v1785, 2147483648
    %v1788 = vmul.f32 %v1787, 1.442695
    %v1789 = vpow.pop %v1788
    %v1790 = vadd.f32 %v1789, 1.0
    %v1791 = vrcp.pop %v1790
    %v1792 = vmul.f32 %v1790, %v1791
    %v1793 = vsub.f32 1.0, %v1792
    %v1794 = vmul.f32 %v1791, %v1793
    %v1795 = vadd.f32 %v1791, %v1794
    %vm1796 = vweird.f32 %v1790
    %vm1797 = vweird.f32 %v1791
    %vm1798 = vmor %vm1796, %vm1797
    %v1799 = vsel %vm1798, %v1791, %v1795
    %v1800 = vand.u32 2147483647, %v1790
    %vm1801 = vcmp.eq.f32.partialorder %v1800, 8.507059e+37
    %v1802 = vand.u32 %v1790, 2147483648
    %v1803 = vor.u32 1.1754944e-38, %v1802
    %v1804 = vsel %vm1801, %v1803, %v1799
    %v1805 = vmul.f32 1.0, %v1804
    %v1806 = vmul.f32 %v1778, %v1716
    %v1807 = vmul.f32 %v1778, %v1782
    %1809 = vrot.lane.b32.xlu0 %v1807, 64
    %v1810 = vpop.permute.xlu0 %1809
    %v1812 = vadd.f32 %v1806, %v1810
    %v1813 = vtanh.pop %v1812
    %1815 = vrot.lane.b32.xlu0 %v1813, 64
    %v1816 = vpop.permute.xlu0 %1815
    %v1818 = vmul.f32 %v1805, %v1816
    %v1819 = vpack.c.bf16 %v1818, %v1818
    %v1820 = vld [vmem:[%s1078] sm:$0xf]
    %v1822 = vsel %vm158, %v1819, 0
    %1824 = vmatpush.bf16.msra.mxu0 0
    %1825 = vmatpush.bf16.msra.mxu0 0
    %1826 = vmatpush.bf16.msra.mxu0 0
    %1827 = vmatpush.bf16.msra.mxu0 0
    %1828 = vmatpush.bf16.msra.mxu0 %v1238
    %1829 = vmatpush.bf16.msra.mxu0 %v1236
    %1830 = vmatpush.bf16.msra.mxu0 %v1234
    %1831 = vmatpush.bf16.msra.mxu0 %v1232
    %1832 = vmatmul.bf16.gmra.mxu0 %v1822
    %v1833 = vpop.f32.mrf.mxu0
    %v1834 = vadd.f32 0.0, %v1833
    %v1835 = vpop.f32.mrf.mxu0
    %1836 = vdwg.mxu0
    %1837 = vmatpush.bf16.msra.mxu0 0
    %1838 = vmatpush.bf16.msra.mxu0 0
    %1839 = vmatpush.bf16.msra.mxu0 0
    %1840 = vmatpush.bf16.msra.mxu0 0
    %1841 = vmatpush.bf16.msra.mxu0 %v1239
    %1842 = vmatpush.bf16.msra.mxu0 %v1237
    %1843 = vmatpush.bf16.msra.mxu0 %v1235
    %1844 = vmatpush.bf16.msra.mxu0 %v1233
    %1845 = vmatmul.bf16.gmra.mxu0 %v1822
    %v1846 = vpop.f32.mrf.mxu0
    %v1847 = vadd.f32 0.0, %v1846
    %v1848 = vpop.f32.mrf.mxu0
    %1849 = vdwg.mxu0
    %v1852 = vrot.slane %v1847, 6
    %v1853 = vsel %vm314, %v1834, %v1852
    %v1855 = vadd.f32 %v1820, %v1853
    %v1856 = vxor.u32 %v1855, 2147483648
    %v1857 = vmul.f32 %v1856, 1.442695
    %v1858 = vpow.pop %v1857
    %v1859 = vadd.f32 %v1858, 1.0
    %v1860 = vrcp.pop %v1859
    %v1861 = vmul.f32 %v1859, %v1860
    %v1862 = vsub.f32 1.0, %v1861
    %v1863 = vmul.f32 %v1860, %v1862
    %v1864 = vadd.f32 %v1860, %v1863
    %vm1865 = vweird.f32 %v1859
    %vm1866 = vweird.f32 %v1860
    %vm1867 = vmor %vm1865, %vm1866
    %v1868 = vsel %vm1867, %v1860, %v1864
    %v1869 = vand.u32 2147483647, %v1859
    %vm1870 = vcmp.eq.f32.partialorder %v1869, 8.507059e+37
    %v1871 = vand.u32 %v1859, 2147483648
    %v1872 = vor.u32 1.1754944e-38, %v1871
    %v1873 = vsel %vm1870, %v1872, %v1868
    %v1874 = vmul.f32 1.0, %v1873
    %v1876 = vrot.slane %v1855, 2
    %v1878 = vtanh.pop %v1876
    %1879 = vrot.lane.b32.xlu0 %v1855, 64
    %v1880 = vpop.permute.xlu0 %1879
    %v1881 = vrot.slane %v1880, 2
    %v1883 = vxor.u32 %v1881, 2147483648
    %v1884 = vmul.f32 %v1883, 1.442695
    %v1885 = vpow.pop %v1884
    %v1886 = vadd.f32 %v1885, 1.0
    %v1887 = vrcp.pop %v1886
    %v1888 = vmul.f32 %v1886, %v1887
    %v1889 = vsub.f32 1.0, %v1888
    %v1890 = vmul.f32 %v1887, %v1889
    %v1891 = vadd.f32 %v1887, %v1890
    %vm1892 = vweird.f32 %v1886
    %vm1893 = vweird.f32 %v1887
    %vm1894 = vmor %vm1892, %vm1893
    %v1895 = vsel %vm1894, %v1887, %v1891
    %v1896 = vand.u32 2147483647, %v1886
    %vm1897 = vcmp.eq.f32.partialorder %v1896, 8.507059e+37
    %v1898 = vand.u32 %v1886, 2147483648
    %v1899 = vor.u32 1.1754944e-38, %v1898
    %v1900 = vsel %vm1897, %v1899, %v1895
    %v1901 = vmul.f32 1.0, %v1900
    %v1902 = vmul.f32 %v1874, %v1812
    %v1903 = vmul.f32 %v1874, %v1878
    %1905 = vrot.lane.b32.xlu0 %v1903, 64
    %v1906 = vpop.permute.xlu0 %1905
    %v1908 = vadd.f32 %v1902, %v1906
    %v1909 = vtanh.pop %v1908
    %1911 = vrot.lane.b32.xlu0 %v1909, 64
    %v1912 = vpop.permute.xlu0 %1911
    %v1914 = vmul.f32 %v1901, %v1912
    %v1915 = vpack.c.bf16 %v1914, %v1914
    %v1916 = vld [vmem:[%s1205] sm:$0xf]
    %v1918 = vsel %vm158, %v1915, 0
    %1920 = vmatpush.bf16.msra.mxu0 0
    %1921 = vmatpush.bf16.msra.mxu0 0
    %1922 = vmatpush.bf16.msra.mxu0 0
    %1923 = vmatpush.bf16.msra.mxu0 0
    %1924 = vmatpush.bf16.msra.mxu0 %v1238
    %1925 = vmatpush.bf16.msra.mxu0 %v1236
    %1926 = vmatpush.bf16.msra.mxu0 %v1234
    %1927 = vmatpush.bf16.msra.mxu0 %v1232
    %1928 = vmatmul.bf16.gmra.mxu0 %v1918
    %v1929 = vpop.f32.mrf.mxu0
    %v1930 = vadd.f32 0.0, %v1929
    %v1931 = vpop.f32.mrf.mxu0
    %1932 = vdwg.mxu0
    %1933 = vmatpush.bf16.msra.mxu0 0
    %1934 = vmatpush.bf16.msra.mxu0 0
    %1935 = vmatpush.bf16.msra.mxu0 0
    %1936 = vmatpush.bf16.msra.mxu0 0
    %1937 = vmatpush.bf16.msra.mxu0 %v1239
    %1938 = vmatpush.bf16.msra.mxu0 %v1237
    %1939 = vmatpush.bf16.msra.mxu0 %v1235
    %1940 = vmatpush.bf16.msra.mxu0 %v1233
    %1941 = vmatmul.bf16.gmra.mxu0 %v1918
    %v1942 = vpop.f32.mrf.mxu0
    %v1943 = vadd.f32 0.0, %v1942
    %v1944 = vpop.f32.mrf.mxu0
    %1945 = vdwg.mxu0
    %v1948 = vrot.slane %v1943, 6
    %v1949 = vsel %vm314, %v1930, %v1948
    %v1951 = vadd.f32 %v1916, %v1949
    %v1952 = vxor.u32 %v1951, 2147483648
    %v1953 = vmul.f32 %v1952, 1.442695
    %v1954 = vpow.pop %v1953
    %v1955 = vadd.f32 %v1954, 1.0
    %v1956 = vrcp.pop %v1955
    %v1957 = vmul.f32 %v1955, %v1956
    %v1958 = vsub.f32 1.0, %v1957
    %v1959 = vmul.f32 %v1956, %v1958
    %v1960 = vadd.f32 %v1956, %v1959
    %vm1961 = vweird.f32 %v1955
    %vm1962 = vweird.f32 %v1956
    %vm1963 = vmor %vm1961, %vm1962
    %v1964 = vsel %vm1963, %v1956, %v1960
    %v1965 = vand.u32 2147483647, %v1955
    %vm1966 = vcmp.eq.f32.partialorder %v1965, 8.507059e+37
    %v1967 = vand.u32 %v1955, 2147483648
    %v1968 = vor.u32 1.1754944e-38, %v1967
    %v1969 = vsel %vm1966, %v1968, %v1964
    %v1970 = vmul.f32 1.0, %v1969
    %v1972 = vrot.slane %v1951, 2
    %v1974 = vtanh.pop %v1972
    %1975 = vrot.lane.b32.xlu0 %v1951, 64
    %v1976 = vpop.permute.xlu0 %1975
    %v1977 = vrot.slane %v1976, 2
    %v1979 = vxor.u32 %v1977, 2147483648
    %v1980 = vmul.f32 %v1979, 1.442695
    %v1981 = vpow.pop %v1980
    %v1982 = vadd.f32 %v1981, 1.0
    %v1983 = vrcp.pop %v1982
    %v1984 = vmul.f32 %v1982, %v1983
    %v1985 = vsub.f32 1.0, %v1984
    %v1986 = vmul.f32 %v1983, %v1985
    %v1987 = vadd.f32 %v1983, %v1986
    %vm1988 = vweird.f32 %v1982
    %vm1989 = vweird.f32 %v1983
    %vm1990 = vmor %vm1988, %vm1989
    %v1991 = vsel %vm1990, %v1983, %v1987
    %v1992 = vand.u32 2147483647, %v1982
    %vm1993 = vcmp.eq.f32.partialorder %v1992, 8.507059e+37
    %v1994 = vand.u32 %v1982, 2147483648
    %v1995 = vor.u32 1.1754944e-38, %v1994
    %v1996 = vsel %vm1993, %v1995, %v1991
    %v1997 = vmul.f32 1.0, %v1996
    %v1998 = vmul.f32 %v1970, %v1908
    %v1999 = vmul.f32 %v1970, %v1974
    %2001 = vrot.lane.b32.xlu0 %v1999, 64
    %v2002 = vpop.permute.xlu0 %2001
    %v2004 = vadd.f32 %v1998, %v2002
    %v2005 = vtanh.pop %v2004
    %2007 = vrot.lane.b32.xlu0 %v2005, 64
    %v2008 = vpop.permute.xlu0 %2007
    %v2010 = vmul.f32 %v1997, %v2008
    %v2011 = vpack.c.bf16 %v2010, %v2010
    %v2012 = vunpack.c.l.bf16 %v2011
    %v2013 = vld [vmem:[%s7] sm:$0xff]
    %v2014 = vld [vmem:[%s7 + $0x8] sm:$0xff]
    %v2015 = vld [vmem:[%s7 + $0x10] sm:$0xff]
    %v2016 = vld [vmem:[%s7 + $0x18] sm:$0xff]
    %v2017 = vld [vmem:[%s7 + $0x20] sm:$0xff]
    %v2018 = vld [vmem:[%s7 + $0x28] sm:$0xff]
    %v2019 = vld [vmem:[%s7 + $0x30] sm:$0xff]
    %v2020 = vld [vmem:[%s7 + $0x38] sm:$0xff]
    %v2021 = vld [vmem:[%s8] sm:$0x1]
    %v2023 = vperm.slane %v2021, 0
    %v2026 = vsel %vm158, %v2012, 0
    %2028 = vmatpush.msra.mxu0 0.0
    %2029 = vmatpush.msra.mxu0 0.0
    %2030 = vmatpush.msra.mxu0 0.0
    %2031 = vmatpush.msra.mxu0 0.0
    %2032 = vmatpush.msra.mxu0 0.0
    %2033 = vmatpush.msra.mxu0 0.0
    %2034 = vmatpush.msra.mxu0 0.0
    %2035 = vmatpush.msra.mxu0 0.0
    %2036 = vmatpush.msra.mxu0 %v2020
    %2037 = vmatpush.msra.mxu0 %v2019
    %2038 = vmatpush.msra.mxu0 %v2018
    %2039 = vmatpush.msra.mxu0 %v2017
    %2040 = vmatpush.msra.mxu0 %v2016
    %2041 = vmatpush.msra.mxu0 %v2015
    %2042 = vmatpush.msra.mxu0 %v2014
    %2043 = vmatpush.msra.mxu0 %v2013
    %2044 = vmatmul.f32.gmra.mxu0 %v2026
    %v2045 = vpop.f32.mrf.mxu0
    %v2046 = vadd.f32 %v2023, %v2045
    %2047 = vdwg.mxu0
    %vm2048 = vcmask 33792
    %2049 = vst.msk [vmem:[#allocation8] sm:$0x3] %vm2048, %v2046
    // Predicated region
    $region46: #{weather_rnn_forward.1} parent=1 // pred_check
      _
    $region47: #{weather_rnn_forward.1} parent=1 // pred_check_branch
      %2051 = sbr.rel (0) target = $region49
    $region48: #{weather_rnn_forward.1} parent=1 // pred_region
      %2053 = vsyncadd [#allocation5], 0
      %s2055 = sshll.u32 [#allocation8], 4
      %s2056 = int_to_ptr.vmem [resolvable:$true] %s2055
      %s2057 = sshll.u32 %s9, 4
      %s2058 = int_to_ptr.hbm [resolvable:$true] %s2057
      %2060 = dma.vmem_to_hbm [thread:$0]  %s2056, 32, %s2058, [#allocation5]
    $region49: #{weather_rnn_forward.1} parent=1 // pred_fallthru
      _
    // Predicated region
    $region50: #{weather_rnn_forward.1} parent=1 // pred_check
      _
    $region51: #{weather_rnn_forward.1} parent=1 // pred_check_branch
      %2062 = sbr.rel (0) target = $region53
    $region52: #{weather_rnn_forward.1} parent=1 // pred_region
      %2064 = dma.done [#allocation5], 32
    $region53: #{weather_rnn_forward.1} parent=1 // pred_fallthru
      _
    %2065 = vsyncpa [#allocation4], 1
    %2066 = vsyncpa [#allocation7], 1
    %2067 = vsyncpa [#allocation5], 1

</llo_original>
